<compile_context>
chip_gen: v5e
topology: v5e:2x2
jax: 0.10.0
libtpu: 0.0.40
codegen_flags: <defaults>
</compile_context>

<pallas_src>
import math

import jax
import jax.numpy as jnp
from jax.experimental import pallas as pl
from jax.experimental.pallas import tpu as pltpu  # noqa: F401  (TPU backend)


# ---------------------------------------------------------------------------
# Config (small, deterministic)
# ---------------------------------------------------------------------------
N = 2            # batch
L = 8            # sequence length
D = 32           # hidden_size
H = 4            # num_attention_heads
DH = D // H      # attention_head_size
DI = 64          # intermediate_size
NH = N * H       # batch*heads (leading batch axis for attention)
LN_EPS = 1e-5


def _layernorm(x, gamma, beta):
    # x: (M, D); gamma/beta: (1, D).
    # Fused stats: var = E[x^2] - E[x]^2 -> two independent lane reductions.
    m = jnp.mean(x, axis=-1, keepdims=True)
    m2 = jnp.mean(x * x, axis=-1, keepdims=True)
    inv = jax.lax.rsqrt(m2 - m * m + LN_EPS)
    return (x - m) * inv * gamma + beta


def bert_layer_kernel(
    hidden_ref,   # (N, L, D)
    mask_ref,     # (N, L)   1 = valid, 0 = invalid
    wqkv_ref,     # (3, H, D, DH)  stacked q/k/v, head-major
    bqkv_ref,     # (3, H, 1, DH)
    wo_ref,       # (H, DH, D)     attention-output dense, head-major
    wi_ref,       # (D, DI)        intermediate dense
    bi_ref,       # (1, DI)
    w2_ref,       # (DI, D)        FFN-output dense
    vec_ref,      # (6, D): rows = [bo, g1, b1, b2, g2, bt2]
    out_ref,      # (N, L, D)
):
    x = hidden_ref[...]                                            # (N, L, D)

    # Heads (and batch) as a leading batch axis: (N*H, L, D) replicated view.
    # Only leading-dim broadcasts/reshapes -> no lane-dim relayouts.
    x_b = jnp.broadcast_to(x[:, None], (N, H, L, D)).reshape(NH, L, D)

    wqkv = wqkv_ref[...]                                            # (3,H,D,DH)
    bqkv = bqkv_ref[...]                                            # (3,H,1,DH)

    def qkv_proj(idx):
        w = jnp.broadcast_to(wqkv[idx][None], (N, H, D, DH)).reshape(NH, D, DH)
        b = jnp.broadcast_to(bqkv[idx][None], (N, H, 1, DH)).reshape(NH, 1, DH)
        return jnp.einsum("bld,bde->ble", x_b, w,
                          preferred_element_type=jnp.float32) + b

    q = qkv_proj(0)                                                 # (NH, L, DH)
    k = qkv_proj(1)
    v = qkv_proj(2)

    # Additive mask built in-kernel from the raw (N, L) mask.
    mask_add = (1.0 - mask_ref[...]) * -10000.0                     # (N, L)
    mask_b = jnp.broadcast_to(mask_add[:, None, None, :],
                              (N, H, L, L)).reshape(NH, L, L)

    scale = 1.0 / math.sqrt(DH)
    scores = jnp.einsum("bqe,bke->bqk", q, k,
                        preferred_element_type=jnp.float32) * scale + mask_b
    m = jnp.max(scores, axis=-1, keepdims=True)
    p = jnp.exp(scores - m)
    p = p * pl.reciprocal(jnp.sum(p, axis=-1, keepdims=True), approx=True)

    ctx = jnp.einsum("bqk,bke->bqe", p, v,
                     preferred_element_type=jnp.float32)            # (NH, L, DH)

    # Attention output dense with the head concat folded in:
    #   concat_h(ctx_h) @ Wo == sum_h ctx_h @ Wo_h.
    wo_b = jnp.broadcast_to(wo_ref[...][None], (N, H, DH, D)).reshape(NH, DH, D)
    attn_parts = jnp.einsum("ble,bef->blf", ctx, wo_b,
                            preferred_element_type=jnp.float32)     # (NH, L, D)

    vecs = vec_ref[...]                                             # (6, D)
    bo, g1, b1 = vecs[0:1], vecs[1:2], vecs[2:3]
    b2, g2, bt2 = vecs[3:4], vecs[4:5], vecs[5:6]

    attn_dense = attn_parts.reshape(N, H, L, D).sum(axis=1) + bo    # (N, L, D)

    # Residual + LayerNorm 1, on the flattened (N*L, D) slab.
    attn_out = _layernorm((attn_dense + x).reshape(N * L, D), g1, b1)

    # FFN: intermediate (ReLU) -> output dense -> residual + LayerNorm 2.
    inter = jnp.dot(attn_out, wi_ref[...],
                    preferred_element_type=jnp.float32) + bi_ref[...]
    inter = jnp.maximum(inter, 0.0)
    ffn = jnp.dot(inter, w2_ref[...],
                  preferred_element_type=jnp.float32) + b2
    out = _layernorm(ffn + attn_out, g2, bt2)                       # (N*L, D)

    out_ref[...] = out.reshape(N, L, D).astype(out_ref.dtype)


def bert_layer_pallas(hidden_states, attention_mask, params):
    """hidden_states: (N, L, D) f32, attention_mask: (N, L) f32 (1=valid)."""
    n, l, d = hidden_states.shape

    # One-time head-major weight re-layouts + operand packing in plain JAX
    # (layout plumbing, free).  The packed hidden dim indexes heads as
    # d_out = h*DH + e (PyTorch transpose_for_scores).
    def to_heads_in(w):       # (D, D) -> (H, D, DH)
        return w.reshape(d, H, DH).transpose(1, 0, 2)

    def to_heads_bias(b):     # (1, D) -> (H, 1, DH)
        return b.reshape(H, DH)[:, None, :]

    wqkv = jnp.stack([to_heads_in(params["wq"]),
                      to_heads_in(params["wk"]),
                      to_heads_in(params["wv"])], axis=0)           # (3,H,D,DH)
    bqkv = jnp.stack([to_heads_bias(params["bq"]),
                      to_heads_bias(params["bk"]),
                      to_heads_bias(params["bv"])], axis=0)         # (3,H,1,DH)
    vecs = jnp.concatenate([params["bo"], params["g1"], params["b1"],
                            params["b2"], params["g2"], params["bt2"]],
                           axis=0)                                  # (6, D)

    args = (
        hidden_states.astype(jnp.float32),
        attention_mask.astype(jnp.float32),
        wqkv, bqkv,
        params["wo"].reshape(H, DH, d),
        params["wi"], params["bi"], params["w2"],
        vecs,
    )

    # Single grid step: whole batch + all weights resident once in VMEM
    # (full-array blocks, no grid, no per-step pipeline overhead).
    return pl.pallas_call(
        bert_layer_kernel,
        out_shape=jax.ShapeDtypeStruct((n, l, d), jnp.float32),
    )(*args)


# ---------------------------------------------------------------------------
# Pure-JAX reference (mirrors the PyTorch module, dropout = identity)
# ---------------------------------------------------------------------------
def bert_layer_ref(hidden_states, attention_mask, p):
    x = hidden_states
    mask_add = ((1.0 - attention_mask) * -10000.0)[:, None, None, :]  # (N,1,1,L)

    def lin(t, w, b):
        return jnp.einsum("nld,df->nlf", t, w) + b[0]

    q = lin(x, p["wq"], p["bq"]).reshape(N, L, H, DH).transpose(0, 2, 1, 3)
    k = lin(x, p["wk"], p["bk"]).reshape(N, L, H, DH).transpose(0, 2, 1, 3)
    v = lin(x, p["wv"], p["bv"]).reshape(N, L, H, DH).transpose(0, 2, 1, 3)
    scores = jnp.einsum("nhqd,nhkd->nhqk", q, k) / math.sqrt(DH) + mask_add
    probs = jax.nn.softmax(scores, axis=-1)
    ctx = jnp.einsum("nhqk,nhkd->nhqd", probs, v).transpose(0, 2, 1, 3).reshape(N, L, D)

    def ln(t, g, b):
        mean = jnp.mean(t, axis=-1, keepdims=True)
        var = jnp.mean((t - mean) ** 2, axis=-1, keepdims=True)
        return (t - mean) / jnp.sqrt(var + LN_EPS) * g[0] + b[0]

    attn_out = ln(lin(ctx, p["wo"], p["bo"]) + x, p["g1"], p["b1"])
    inter = jax.nn.relu(lin(attn_out, p["wi"], p["bi"]))
    out = ln(lin(inter, p["w2"], p["b2"]) + attn_out, p["g2"], p["bt2"])
    return out


# ---------------------------------------------------------------------------
# Main
# ---------------------------------------------------------------------------
if __name__ == "__main__":
    keys = jax.random.split(jax.random.PRNGKey(0), 18)

    def init(k, shape, scale=0.05):
        return (scale * jax.random.normal(k, shape)).astype(jnp.float32)

    params = {
        "wq": init(keys[0], (D, D)),  "bq": init(keys[1], (1, D)),
        "wk": init(keys[2], (D, D)),  "bk": init(keys[3], (1, D)),
        "wv": init(keys[4], (D, D)),  "bv": init(keys[5], (1, D)),
        "wo": init(keys[6], (D, D)),  "bo": init(keys[7], (1, D)),
        "g1": jnp.ones((1, D), jnp.float32) + init(keys[8], (1, D)),
        "b1": init(keys[9], (1, D)),
        "wi": init(keys[10], (D, DI)), "bi": init(keys[11], (1, DI)),
        "w2": init(keys[12], (DI, D)), "b2": init(keys[13], (1, D)),
        "g2": jnp.ones((1, D), jnp.float32) + init(keys[14], (1, D)),
        "bt2": init(keys[15], (1, D)),
    }

    hidden = jax.random.normal(keys[16], (N, L, D), jnp.float32)
    # mask: 1 = valid, 0 = invalid; last two positions of batch 1 invalid
    attention_mask = jnp.ones((N, L), jnp.float32)
    attention_mask = attention_mask.at[1, -2:].set(0.0)

    out = bert_layer_pallas(hidden, attention_mask, params)
    out = jax.block_until_ready(out)

    ref = bert_layer_ref(hidden, attention_mask, params)
    assert out.shape == (N, L, D)
    # 1e-3 tolerance: all math is f32 except the EUP approx reciprocal in the
    # softmax normalization (pl.reciprocal(approx=True)).
    err = float(jnp.max(jnp.abs(out - ref)))
    assert jnp.allclose(out, ref, atol=1e-3, rtol=1e-3), err

    print("KERNEL_OK")
</pallas_src>

<mosaic_0001>
module attributes {stable_mosaic.version = 11 : i64} {
  func.func @bert_layer_kernel(%arg0: memref<2x8x32xf32, #tpu.memory_space<vmem>>, %arg1: memref<2x8xf32, #tpu.memory_space<vmem>>, %arg2: memref<3x4x32x8xf32, #tpu.memory_space<vmem>>, %arg3: memref<3x4x1x8xf32, #tpu.memory_space<vmem>>, %arg4: memref<4x8x32xf32, #tpu.memory_space<vmem>>, %arg5: memref<32x64xf32, #tpu.memory_space<vmem>>, %arg6: memref<1x64xf32, #tpu.memory_space<vmem>>, %arg7: memref<64x32xf32, #tpu.memory_space<vmem>>, %arg8: memref<6x32xf32, #tpu.memory_space<vmem>>, %arg9: memref<2x8x32xf32, #tpu.memory_space<vmem>>) attributes {dimension_semantics = [], scalar_prefetch = 0 : i64, scratch_operands = 0 : i64, tpu.core_type = #tpu.core_type<tc>} {
    %c0 = arith.constant 0 : index
    %c0_0 = arith.constant 0 : index
    %c0_1 = arith.constant 0 : index
    %0 = vector.load %arg0[%c0, %c0_0, %c0_1] : memref<2x8x32xf32, #tpu.memory_space<vmem>>, vector<2x8x32xf32>
    %1 = vector.shape_cast %0 : vector<2x8x32xf32> to vector<2x1x8x32xf32>
    %2 = vector.shape_cast %1 : vector<2x1x8x32xf32> to vector<2x1x8x32xf32>
    %3 = vector.broadcast %2 : vector<2x1x8x32xf32> to vector<2x4x8x32xf32>
    %4 = vector.shape_cast %3 : vector<2x4x8x32xf32> to vector<8x8x32xf32>
    %c0_2 = arith.constant 0 : index
    %c0_3 = arith.constant 0 : index
    %c0_4 = arith.constant 0 : index
    %c0_5 = arith.constant 0 : index
    %5 = vector.load %arg2[%c0_2, %c0_3, %c0_4, %c0_5] : memref<3x4x32x8xf32, #tpu.memory_space<vmem>>, vector<3x4x32x8xf32>
    %c0_6 = arith.constant 0 : index
    %c0_7 = arith.constant 0 : index
    %c0_8 = arith.constant 0 : index
    %c0_9 = arith.constant 0 : index
    %6 = vector.load %arg3[%c0_6, %c0_7, %c0_8, %c0_9] : memref<3x4x1x8xf32, #tpu.memory_space<vmem>>, vector<3x4x1x8xf32>
    %7 = vector.extract_strided_slice %5 {offsets = [0, 0, 0, 0], sizes = [1, 4, 32, 8], strides = [1, 1, 1, 1]} : vector<3x4x32x8xf32> to vector<1x4x32x8xf32>
    %8 = vector.shape_cast %7 : vector<1x4x32x8xf32> to vector<4x32x8xf32>
    %9 = vector.shape_cast %8 : vector<4x32x8xf32> to vector<1x4x32x8xf32>
    %10 = vector.shape_cast %9 : vector<1x4x32x8xf32> to vector<1x4x32x8xf32>
    %11 = vector.broadcast %10 : vector<1x4x32x8xf32> to vector<2x4x32x8xf32>
    %12 = vector.shape_cast %11 : vector<2x4x32x8xf32> to vector<8x32x8xf32>
    %13 = vector.extract_strided_slice %6 {offsets = [0, 0, 0, 0], sizes = [1, 4, 1, 8], strides = [1, 1, 1, 1]} : vector<3x4x1x8xf32> to vector<1x4x1x8xf32>
    %14 = vector.shape_cast %13 : vector<1x4x1x8xf32> to vector<4x1x8xf32>
    %15 = vector.shape_cast %14 : vector<4x1x8xf32> to vector<1x4x1x8xf32>
    %16 = vector.shape_cast %15 : vector<1x4x1x8xf32> to vector<1x4x1x8xf32>
    %17 = vector.broadcast %16 : vector<1x4x1x8xf32> to vector<2x4x1x8xf32>
    %18 = vector.shape_cast %17 : vector<2x4x1x8xf32> to vector<8x1x8xf32>
    "tpu.trace_start"() <{level = 10 : i32, message = "bld,bde->ble"}> : () -> ()
    %cst = arith.constant dense<0.000000e+00> : vector<8x8x8xf32>
    %19 = tpu.matmul %4, %12, %cst {dimension_numbers = #tpu.dot_dimension_numbers<[2], [1], [1], [2], [0, 0, 0, 1, 1, 2], [0], [0]>} : vector<8x8x32xf32>, vector<8x32x8xf32>, vector<8x8x8xf32> -> vector<8x8x8xf32>
    "tpu.trace_stop"() : () -> ()
    %20 = vector.broadcast %18 : vector<8x1x8xf32> to vector<8x8x8xf32>
    %21 = arith.addf %19, %20 : vector<8x8x8xf32>
    %22 = vector.extract_strided_slice %5 {offsets = [1, 0, 0, 0], sizes = [1, 4, 32, 8], strides = [1, 1, 1, 1]} : vector<3x4x32x8xf32> to vector<1x4x32x8xf32>
    %23 = vector.shape_cast %22 : vector<1x4x32x8xf32> to vector<4x32x8xf32>
    %24 = vector.shape_cast %23 : vector<4x32x8xf32> to vector<1x4x32x8xf32>
    %25 = vector.shape_cast %24 : vector<1x4x32x8xf32> to vector<1x4x32x8xf32>
    %26 = vector.broadcast %25 : vector<1x4x32x8xf32> to vector<2x4x32x8xf32>
    %27 = vector.shape_cast %26 : vector<2x4x32x8xf32> to vector<8x32x8xf32>
    %28 = vector.extract_strided_slice %6 {offsets = [1, 0, 0, 0], sizes = [1, 4, 1, 8], strides = [1, 1, 1, 1]} : vector<3x4x1x8xf32> to vector<1x4x1x8xf32>
    %29 = vector.shape_cast %28 : vector<1x4x1x8xf32> to vector<4x1x8xf32>
    %30 = vector.shape_cast %29 : vector<4x1x8xf32> to vector<1x4x1x8xf32>
    %31 = vector.shape_cast %30 : vector<1x4x1x8xf32> to vector<1x4x1x8xf32>
    %32 = vector.broadcast %31 : vector<1x4x1x8xf32> to vector<2x4x1x8xf32>
    %33 = vector.shape_cast %32 : vector<2x4x1x8xf32> to vector<8x1x8xf32>
    "tpu.trace_start"() <{level = 10 : i32, message = "bld,bde->ble"}> : () -> ()
    %cst_10 = arith.constant dense<0.000000e+00> : vector<8x8x8xf32>
    %34 = tpu.matmul %4, %27, %cst_10 {dimension_numbers = #tpu.dot_dimension_numbers<[2], [1], [1], [2], [0, 0, 0, 1, 1, 2], [0], [0]>} : vector<8x8x32xf32>, vector<8x32x8xf32>, vector<8x8x8xf32> -> vector<8x8x8xf32>
    "tpu.trace_stop"() : () -> ()
    %35 = vector.broadcast %33 : vector<8x1x8xf32> to vector<8x8x8xf32>
    %36 = arith.addf %34, %35 : vector<8x8x8xf32>
    %37 = vector.extract_strided_slice %5 {offsets = [2, 0, 0, 0], sizes = [1, 4, 32, 8], strides = [1, 1, 1, 1]} : vector<3x4x32x8xf32> to vector<1x4x32x8xf32>
    %38 = vector.shape_cast %37 : vector<1x4x32x8xf32> to vector<4x32x8xf32>
    %39 = vector.shape_cast %38 : vector<4x32x8xf32> to vector<1x4x32x8xf32>
    %40 = vector.shape_cast %39 : vector<1x4x32x8xf32> to vector<1x4x32x8xf32>
    %41 = vector.broadcast %40 : vector<1x4x32x8xf32> to vector<2x4x32x8xf32>
    %42 = vector.shape_cast %41 : vector<2x4x32x8xf32> to vector<8x32x8xf32>
    %43 = vector.extract_strided_slice %6 {offsets = [2, 0, 0, 0], sizes = [1, 4, 1, 8], strides = [1, 1, 1, 1]} : vector<3x4x1x8xf32> to vector<1x4x1x8xf32>
    %44 = vector.shape_cast %43 : vector<1x4x1x8xf32> to vector<4x1x8xf32>
    %45 = vector.shape_cast %44 : vector<4x1x8xf32> to vector<1x4x1x8xf32>
    %46 = vector.shape_cast %45 : vector<1x4x1x8xf32> to vector<1x4x1x8xf32>
    %47 = vector.broadcast %46 : vector<1x4x1x8xf32> to vector<2x4x1x8xf32>
    %48 = vector.shape_cast %47 : vector<2x4x1x8xf32> to vector<8x1x8xf32>
    "tpu.trace_start"() <{level = 10 : i32, message = "bld,bde->ble"}> : () -> ()
    %cst_11 = arith.constant dense<0.000000e+00> : vector<8x8x8xf32>
    %49 = tpu.matmul %4, %42, %cst_11 {dimension_numbers = #tpu.dot_dimension_numbers<[2], [1], [1], [2], [0, 0, 0, 1, 1, 2], [0], [0]>} : vector<8x8x32xf32>, vector<8x32x8xf32>, vector<8x8x8xf32> -> vector<8x8x8xf32>
    "tpu.trace_stop"() : () -> ()
    %50 = vector.broadcast %48 : vector<8x1x8xf32> to vector<8x8x8xf32>
    %51 = arith.addf %49, %50 : vector<8x8x8xf32>
    %c0_12 = arith.constant 0 : index
    %c0_13 = arith.constant 0 : index
    %52 = vector.load %arg1[%c0_12, %c0_13] : memref<2x8xf32, #tpu.memory_space<vmem>>, vector<2x8xf32>
    %cst_14 = arith.constant 1.000000e+00 : f32
    %53 = vector.broadcast %cst_14 : f32 to vector<2x8xf32>
    %54 = arith.subf %53, %52 : vector<2x8xf32>
    %cst_15 = arith.constant -1.000000e+04 : f32
    %55 = vector.broadcast %cst_15 : f32 to vector<2x8xf32>
    %56 = arith.mulf %54, %55 : vector<2x8xf32>
    %57 = vector.shape_cast %56 : vector<2x8xf32> to vector<2x1x1x8xf32>
    %58 = vector.shape_cast %57 : vector<2x1x1x8xf32> to vector<2x1x1x8xf32>
    %59 = vector.broadcast %58 : vector<2x1x1x8xf32> to vector<2x4x8x8xf32>
    %60 = vector.shape_cast %59 : vector<2x4x8x8xf32> to vector<8x8x8xf32>
    "tpu.trace_start"() <{level = 10 : i32, message = "bqe,bke->bqk"}> : () -> ()
    %cst_16 = arith.constant dense<0.000000e+00> : vector<8x8x8xf32>
    %61 = tpu.matmul %21, %36, %cst_16 {dimension_numbers = #tpu.dot_dimension_numbers<[2], [2], [1], [1], [0, 0, 0, 1, 1, 1], [0], [0]>} : vector<8x8x8xf32>, vector<8x8x8xf32>, vector<8x8x8xf32> -> vector<8x8x8xf32>
    "tpu.trace_stop"() : () -> ()
    %cst_17 = arith.constant 0.353553385 : f32
    %62 = vector.broadcast %cst_17 : f32 to vector<8x8x8xf32>
    %63 = arith.mulf %61, %62 : vector<8x8x8xf32>
    %64 = arith.addf %63, %60 : vector<8x8x8xf32>
    %cst_18 = arith.constant dense<0xFF800000> : vector<8x8xf32>
    %65 = vector.multi_reduction <maximumf>, %64, %cst_18 [2] : vector<8x8x8xf32> to vector<8x8xf32>
    %66 = vector.shape_cast %65 : vector<8x8xf32> to vector<8x8x1xf32>
    %67 = vector.broadcast %66 : vector<8x8x1xf32> to vector<8x8x8xf32>
    %68 = arith.subf %64, %67 : vector<8x8x8xf32>
    %69 = math.exp %68 : vector<8x8x8xf32>
    %cst_19 = arith.constant dense<0.000000e+00> : vector<8x8xf32>
    %70 = vector.multi_reduction <add>, %69, %cst_19 [2] : vector<8x8x8xf32> to vector<8x8xf32>
    %71 = vector.shape_cast %70 : vector<8x8xf32> to vector<8x8x1xf32>
    %72 = tpu.reciprocal %71 {approx = true} : vector<8x8x1xf32> -> vector<8x8x1xf32>
    %73 = vector.broadcast %72 : vector<8x8x1xf32> to vector<8x8x8xf32>
    %74 = arith.mulf %69, %73 : vector<8x8x8xf32>
    "tpu.trace_start"() <{level = 10 : i32, message = "bqk,bke->bqe"}> : () -> ()
    %cst_20 = arith.constant dense<0.000000e+00> : vector<8x8x8xf32>
    %75 = tpu.matmul %74, %51, %cst_20 {dimension_numbers = #tpu.dot_dimension_numbers<[2], [1], [1], [2], [0, 0, 0, 1, 1, 2], [0], [0]>} : vector<8x8x8xf32>, vector<8x8x8xf32>, vector<8x8x8xf32> -> vector<8x8x8xf32>
    "tpu.trace_stop"() : () -> ()
    %c0_21 = arith.constant 0 : index
    %c0_22 = arith.constant 0 : index
    %c0_23 = arith.constant 0 : index
    %76 = vector.load %arg4[%c0_21, %c0_22, %c0_23] : memref<4x8x32xf32, #tpu.memory_space<vmem>>, vector<4x8x32xf32>
    %77 = vector.shape_cast %76 : vector<4x8x32xf32> to vector<1x4x8x32xf32>
    %78 = vector.shape_cast %77 : vector<1x4x8x32xf32> to vector<1x4x8x32xf32>
    %79 = vector.broadcast %78 : vector<1x4x8x32xf32> to vector<2x4x8x32xf32>
    %80 = vector.shape_cast %79 : vector<2x4x8x32xf32> to vector<8x8x32xf32>
    "tpu.trace_start"() <{level = 10 : i32, message = "ble,bef->blf"}> : () -> ()
    %cst_24 = arith.constant dense<0.000000e+00> : vector<8x8x32xf32>
    %81 = tpu.matmul %75, %80, %cst_24 {dimension_numbers = #tpu.dot_dimension_numbers<[2], [1], [1], [2], [0, 0, 0, 1, 1, 2], [0], [0]>} : vector<8x8x8xf32>, vector<8x8x32xf32>, vector<8x8x32xf32> -> vector<8x8x32xf32>
    "tpu.trace_stop"() : () -> ()
    %c0_25 = arith.constant 0 : index
    %c0_26 = arith.constant 0 : index
    %82 = vector.load %arg8[%c0_25, %c0_26] : memref<6x32xf32, #tpu.memory_space<vmem>>, vector<6x32xf32>
    %83 = vector.extract_strided_slice %82 {offsets = [0, 0], sizes = [1, 32], strides = [1, 1]} : vector<6x32xf32> to vector<1x32xf32>
    %84 = vector.extract_strided_slice %82 {offsets = [1, 0], sizes = [1, 32], strides = [1, 1]} : vector<6x32xf32> to vector<1x32xf32>
    %85 = vector.extract_strided_slice %82 {offsets = [2, 0], sizes = [1, 32], strides = [1, 1]} : vector<6x32xf32> to vector<1x32xf32>
    %86 = vector.extract_strided_slice %82 {offsets = [3, 0], sizes = [1, 32], strides = [1, 1]} : vector<6x32xf32> to vector<1x32xf32>
    %87 = vector.extract_strided_slice %82 {offsets = [4, 0], sizes = [1, 32], strides = [1, 1]} : vector<6x32xf32> to vector<1x32xf32>
    %88 = vector.extract_strided_slice %82 {offsets = [5, 0], sizes = [1, 32], strides = [1, 1]} : vector<6x32xf32> to vector<1x32xf32>
    %89 = vector.shape_cast %81 : vector<8x8x32xf32> to vector<2x4x8x32xf32>
    %cst_27 = arith.constant dense<0.000000e+00> : vector<2x8x32xf32>
    %90 = vector.multi_reduction <add>, %89, %cst_27 [1] : vector<2x4x8x32xf32> to vector<2x8x32xf32>
    %91 = vector.shape_cast %83 : vector<1x32xf32> to vector<1x1x32xf32>
    %92 = vector.broadcast %91 : vector<1x1x32xf32> to vector<2x8x32xf32>
    %93 = arith.addf %90, %92 : vector<2x8x32xf32>
    %94 = arith.addf %93, %0 : vector<2x8x32xf32>
    %95 = vector.shape_cast %94 : vector<2x8x32xf32> to vector<16x32xf32>
    %cst_28 = arith.constant dense<0.000000e+00> : vector<16xf32>
    %96 = vector.multi_reduction <add>, %95, %cst_28 [1] : vector<16x32xf32> to vector<16xf32>
    %97 = vector.shape_cast %96 : vector<16xf32> to vector<16x1xf32>
    %cst_29 = arith.constant 3.200000e+01 : f32
    %98 = vector.broadcast %cst_29 : f32 to vector<16x1xf32>
    %99 = arith.divf %97, %98 : vector<16x1xf32>
    %100 = arith.mulf %95, %95 : vector<16x32xf32>
    %cst_30 = arith.constant dense<0.000000e+00> : vector<16xf32>
    %101 = vector.multi_reduction <add>, %100, %cst_30 [1] : vector<16x32xf32> to vector<16xf32>
    %102 = vector.shape_cast %101 : vector<16xf32> to vector<16x1xf32>
    %cst_31 = arith.constant 3.200000e+01 : f32
    %103 = vector.broadcast %cst_31 : f32 to vector<16x1xf32>
    %104 = arith.divf %102, %103 : vector<16x1xf32>
    %105 = arith.mulf %99, %99 : vector<16x1xf32>
    %106 = arith.subf %104, %105 : vector<16x1xf32>
    %cst_32 = arith.constant 9.99999974E-6 : f32
    %107 = vector.broadcast %cst_32 : f32 to vector<16x1xf32>
    %108 = arith.addf %106, %107 : vector<16x1xf32>
    %109 = math.rsqrt %108 : vector<16x1xf32>
    %110 = vector.broadcast %99 : vector<16x1xf32> to vector<16x32xf32>
    %111 = arith.subf %95, %110 : vector<16x32xf32>
    %112 = vector.broadcast %109 : vector<16x1xf32> to vector<16x32xf32>
    %113 = arith.mulf %111, %112 : vector<16x32xf32>
    %114 = vector.broadcast %84 : vector<1x32xf32> to vector<16x32xf32>
    %115 = arith.mulf %113, %114 : vector<16x32xf32>
    %116 = vector.broadcast %85 : vector<1x32xf32> to vector<16x32xf32>
    %117 = arith.addf %115, %116 : vector<16x32xf32>
    %c0_33 = arith.constant 0 : index
    %c0_34 = arith.constant 0 : index
    %118 = vector.load %arg5[%c0_33, %c0_34] : memref<32x64xf32, #tpu.memory_space<vmem>>, vector<32x64xf32>
    %cst_35 = arith.constant dense<0.000000e+00> : vector<16x64xf32>
    %119 = tpu.matmul %117, %118, %cst_35 {dimension_numbers = #tpu.dot_dimension_numbers<[1], [0], [0], [1], [0, 0, 1, 1], [], []>} : vector<16x32xf32>, vector<32x64xf32>, vector<16x64xf32> -> vector<16x64xf32>
    %c0_36 = arith.constant 0 : index
    %c0_37 = arith.constant 0 : index
    %120 = vector.load %arg6[%c0_36, %c0_37] : memref<1x64xf32, #tpu.memory_space<vmem>>, vector<1x64xf32>
    %121 = vector.broadcast %120 : vector<1x64xf32> to vector<16x64xf32>
    %122 = arith.addf %119, %121 : vector<16x64xf32>
    %cst_38 = arith.constant 0.000000e+00 : f32
    %123 = vector.broadcast %cst_38 : f32 to vector<16x64xf32>
    %124 = arith.maximumf %122, %123 : vector<16x64xf32>
    %c0_39 = arith.constant 0 : index
    %c0_40 = arith.constant 0 : index
    %125 = vector.load %arg7[%c0_39, %c0_40] : memref<64x32xf32, #tpu.memory_space<vmem>>, vector<64x32xf32>
    %cst_41 = arith.constant dense<0.000000e+00> : vector<16x32xf32>
    %126 = tpu.matmul %124, %125, %cst_41 {dimension_numbers = #tpu.dot_dimension_numbers<[1], [0], [0], [1], [0, 0, 1, 1], [], []>} : vector<16x64xf32>, vector<64x32xf32>, vector<16x32xf32> -> vector<16x32xf32>
    %127 = vector.broadcast %86 : vector<1x32xf32> to vector<16x32xf32>
    %128 = arith.addf %126, %127 : vector<16x32xf32>
    %129 = arith.addf %128, %117 : vector<16x32xf32>
    %cst_42 = arith.constant dense<0.000000e+00> : vector<16xf32>
    %130 = vector.multi_reduction <add>, %129, %cst_42 [1] : vector<16x32xf32> to vector<16xf32>
    %131 = vector.shape_cast %130 : vector<16xf32> to vector<16x1xf32>
    %cst_43 = arith.constant 3.200000e+01 : f32
    %132 = vector.broadcast %cst_43 : f32 to vector<16x1xf32>
    %133 = arith.divf %131, %132 : vector<16x1xf32>
    %134 = arith.mulf %129, %129 : vector<16x32xf32>
    %cst_44 = arith.constant dense<0.000000e+00> : vector<16xf32>
    %135 = vector.multi_reduction <add>, %134, %cst_44 [1] : vector<16x32xf32> to vector<16xf32>
    %136 = vector.shape_cast %135 : vector<16xf32> to vector<16x1xf32>
    %cst_45 = arith.constant 3.200000e+01 : f32
    %137 = vector.broadcast %cst_45 : f32 to vector<16x1xf32>
    %138 = arith.divf %136, %137 : vector<16x1xf32>
    %139 = arith.mulf %133, %133 : vector<16x1xf32>
    %140 = arith.subf %138, %139 : vector<16x1xf32>
    %cst_46 = arith.constant 9.99999974E-6 : f32
    %141 = vector.broadcast %cst_46 : f32 to vector<16x1xf32>
    %142 = arith.addf %140, %141 : vector<16x1xf32>
    %143 = math.rsqrt %142 : vector<16x1xf32>
    %144 = vector.broadcast %133 : vector<16x1xf32> to vector<16x32xf32>
    %145 = arith.subf %129, %144 : vector<16x32xf32>
    %146 = vector.broadcast %143 : vector<16x1xf32> to vector<16x32xf32>
    %147 = arith.mulf %145, %146 : vector<16x32xf32>
    %148 = vector.broadcast %87 : vector<1x32xf32> to vector<16x32xf32>
    %149 = arith.mulf %147, %148 : vector<16x32xf32>
    %150 = vector.broadcast %88 : vector<1x32xf32> to vector<16x32xf32>
    %151 = arith.addf %149, %150 : vector<16x32xf32>
    %152 = vector.shape_cast %151 : vector<16x32xf32> to vector<2x8x32xf32>
    %c0_47 = arith.constant 0 : index
    %c0_48 = arith.constant 0 : index
    %c0_49 = arith.constant 0 : index
    %153 = vector.load %arg9[%c0_47, %c0_48, %c0_49] : memref<2x8x32xf32, #tpu.memory_space<vmem>>, vector<2x8x32xf32>
    tpu.vector_store %arg9[%c0_47, %c0_48, %c0_49], %152 {strides = array<i32>} : memref<2x8x32xf32, #tpu.memory_space<vmem>>, vector<2x8x32xf32>,
    return
  }
}

</mosaic_0001>

<llo_original>
// kernel: tpu_custom_call.1
$region0: #{tpu_custom_call.1}
  #allocation0 [shape = 'u32[]', space=smem, size = 0x4, offset = 0x4, fixed_abs, tag = 'smem constant byte address 0x4 - core index']
  #allocation1 [shape = 'u32[72,128]{1,0:T(1,128)}', space=vmem, size = 0x9000, scoped, tag = 'internal scratch']
  %s0 = inlined_call_operand.vmem [shape: f32[2,8,32], index: 0, kind: input, shape index: {}]
  %s1 = inlined_call_operand.vmem [shape: f32[2,8], index: 1, kind: input, shape index: {}]
  %s2 = inlined_call_operand.vmem [shape: f32[3,4,32,8], index: 2, kind: input, shape index: {}]
  %s3 = inlined_call_operand.vmem [shape: f32[3,4,1,8], index: 3, kind: input, shape index: {}]
  %s4 = inlined_call_operand.vmem [shape: f32[4,8,32], index: 4, kind: input, shape index: {}]
  %s5 = inlined_call_operand.vmem [shape: f32[32,64], index: 5, kind: input, shape index: {}]
  %s6 = inlined_call_operand.vmem [shape: f32[1,64], index: 6, kind: input, shape index: {}]
  %s7 = inlined_call_operand.vmem [shape: f32[64,32], index: 7, kind: input, shape index: {}]
  %s8 = inlined_call_operand.vmem [shape: f32[6,32], index: 8, kind: input, shape index: {}]
  %s9 = inlined_call_operand.hbm [shape: f32[2,8,32], index: 9, kind: output, shape index: {}]
  %s10 = sld [smem:[#allocation0]]
  $region46: #{tpu_custom_call.1} parent=0
    _
  %s12 = ssub.s32 1, %s10
  %s13 = scalar_select 0, %s12, %s10
  $region1: #{tpu_custom_call.1} parent=0
    #allocation2 [shape = 'u8[8192]{0}', space=vmem, size = 0x2000, scoped, tag = 'output window, operand 0, single buffered']
    #allocation3 [shape = 's32[1]{0}', space=sflag, size = 0x4, scoped, tag = 'scoped memory for tpu_custom_call.1']
    %14 = vsyncpa [#allocation3], 0
    // Predicated region
    $region2: #{tpu_custom_call.1} parent=1 // pred_check
      _
    $region3: #{tpu_custom_call.1} parent=1 // pred_check_branch
      %16 = sbr.rel (0) target = $region5
    $region4: #{tpu_custom_call.1} parent=1 // pred_region
      _
    $region5: #{tpu_custom_call.1} parent=1 // pred_fallthru
      _
    // Predicated region
    $region6: #{tpu_custom_call.1} parent=1 // pred_check
      _
    $region7: #{tpu_custom_call.1} parent=1 // pred_check_branch
      %18 = sbr.rel (0) target = $region9
    $region8: #{tpu_custom_call.1} parent=1 // pred_region
      _
    $region9: #{tpu_custom_call.1} parent=1 // pred_fallthru
      _
    // Predicated region
    $region10: #{tpu_custom_call.1} parent=1 // pred_check
      _
    $region11: #{tpu_custom_call.1} parent=1 // pred_check_branch
      %20 = sbr.rel (0) target = $region13
    $region12: #{tpu_custom_call.1} parent=1 // pred_region
      _
    $region13: #{tpu_custom_call.1} parent=1 // pred_fallthru
      _
    // Predicated region
    $region14: #{tpu_custom_call.1} parent=1 // pred_check
      _
    $region15: #{tpu_custom_call.1} parent=1 // pred_check_branch
      %22 = sbr.rel (0) target = $region17
    $region16: #{tpu_custom_call.1} parent=1 // pred_region
      _
    $region17: #{tpu_custom_call.1} parent=1 // pred_fallthru
      _
    // Predicated region
    $region18: #{tpu_custom_call.1} parent=1 // pred_check
      _
    $region19: #{tpu_custom_call.1} parent=1 // pred_check_branch
      %24 = sbr.rel (0) target = $region21
    $region20: #{tpu_custom_call.1} parent=1 // pred_region
      _
    $region21: #{tpu_custom_call.1} parent=1 // pred_fallthru
      _
    // Predicated region
    $region22: #{tpu_custom_call.1} parent=1 // pred_check
      _
    $region23: #{tpu_custom_call.1} parent=1 // pred_check_branch
      %26 = sbr.rel (0) target = $region25
    $region24: #{tpu_custom_call.1} parent=1 // pred_region
      _
    $region25: #{tpu_custom_call.1} parent=1 // pred_fallthru
      _
    // Predicated region
    $region26: #{tpu_custom_call.1} parent=1 // pred_check
      _
    $region27: #{tpu_custom_call.1} parent=1 // pred_check_branch
      %28 = sbr.rel (0) target = $region29
    $region28: #{tpu_custom_call.1} parent=1 // pred_region
      _
    $region29: #{tpu_custom_call.1} parent=1 // pred_fallthru
      _
    // Predicated region
    $region30: #{tpu_custom_call.1} parent=1 // pred_check
      _
    $region31: #{tpu_custom_call.1} parent=1 // pred_check_branch
      %30 = sbr.rel (0) target = $region33
    $region32: #{tpu_custom_call.1} parent=1 // pred_region
      _
    $region33: #{tpu_custom_call.1} parent=1 // pred_fallthru
      _
    // Predicated region
    $region34: #{tpu_custom_call.1} parent=1 // pred_check
      _
    $region35: #{tpu_custom_call.1} parent=1 // pred_check_branch
      %32 = sbr.rel (0) target = $region37
    $region36: #{tpu_custom_call.1} parent=1 // pred_region
      _
    $region37: #{tpu_custom_call.1} parent=1 // pred_fallthru
      _
    %v33 = vld [vmem:[%s0] sm:$0xff]
    %v34 = vld [vmem:[%s0 + $0x8] sm:$0xff]
    %v35 = vld [vmem:[%s2] sm:$0xff]
    %v36 = vld [vmem:[%s2 + $0x8] sm:$0xff]
    %v37 = vld [vmem:[%s2 + $0x10] sm:$0xff]
    %v38 = vld [vmem:[%s2 + $0x18] sm:$0xff]
    %v39 = vld [vmem:[%s2 + $0x20] sm:$0xff]
    %v40 = vld [vmem:[%s2 + $0x28] sm:$0xff]
    %v41 = vld [vmem:[%s2 + $0x30] sm:$0xff]
    %v42 = vld [vmem:[%s2 + $0x38] sm:$0xff]
    %v43 = vld [vmem:[%s2 + $0x40] sm:$0xff]
    %v44 = vld [vmem:[%s2 + $0x48] sm:$0xff]
    %v45 = vld [vmem:[%s2 + $0x50] sm:$0xff]
    %v46 = vld [vmem:[%s2 + $0x58] sm:$0xff]
    %v47 = vld [vmem:[%s2 + $0x60] sm:$0xff]
    %v48 = vld [vmem:[%s2 + $0x68] sm:$0xff]
    %v49 = vld [vmem:[%s2 + $0x70] sm:$0xff]
    %v50 = vld [vmem:[%s2 + $0x78] sm:$0xff]
    %v51 = vld [vmem:[%s2 + $0x80] sm:$0xff]
    %v52 = vld [vmem:[%s2 + $0x88] sm:$0xff]
    %v53 = vld [vmem:[%s2 + $0x90] sm:$0xff]
    %v54 = vld [vmem:[%s2 + $0x98] sm:$0xff]
    %v55 = vld [vmem:[%s2 + $0xa0] sm:$0xff]
    %v56 = vld [vmem:[%s2 + $0xa8] sm:$0xff]
    %v57 = vld [vmem:[%s2 + $0xb0] sm:$0xff]
    %v58 = vld [vmem:[%s2 + $0xb8] sm:$0xff]
    %v59 = vld [vmem:[%s2 + $0xc0] sm:$0xff]
    %v60 = vld [vmem:[%s2 + $0xc8] sm:$0xff]
    %v61 = vld [vmem:[%s2 + $0xd0] sm:$0xff]
    %v62 = vld [vmem:[%s2 + $0xd8] sm:$0xff]
    %v63 = vld [vmem:[%s2 + $0xe0] sm:$0xff]
    %v64 = vld [vmem:[%s2 + $0xe8] sm:$0xff]
    %v65 = vld [vmem:[%s2 + $0xf0] sm:$0xff]
    %v66 = vld [vmem:[%s2 + $0xf8] sm:$0xff]
    %v67 = vld [vmem:[%s2 + $0x100] sm:$0xff]
    %v68 = vld [vmem:[%s2 + $0x108] sm:$0xff]
    %v69 = vld [vmem:[%s2 + $0x110] sm:$0xff]
    %v70 = vld [vmem:[%s2 + $0x118] sm:$0xff]
    %v71 = vld [vmem:[%s2 + $0x120] sm:$0xff]
    %v72 = vld [vmem:[%s2 + $0x128] sm:$0xff]
    %v73 = vld [vmem:[%s2 + $0x130] sm:$0xff]
    %v74 = vld [vmem:[%s2 + $0x138] sm:$0xff]
    %v75 = vld [vmem:[%s2 + $0x140] sm:$0xff]
    %v76 = vld [vmem:[%s2 + $0x148] sm:$0xff]
    %v77 = vld [vmem:[%s2 + $0x150] sm:$0xff]
    %v78 = vld [vmem:[%s2 + $0x158] sm:$0xff]
    %v79 = vld [vmem:[%s2 + $0x160] sm:$0xff]
    %v80 = vld [vmem:[%s2 + $0x168] sm:$0xff]
    %v81 = vld [vmem:[%s2 + $0x170] sm:$0xff]
    %v82 = vld [vmem:[%s2 + $0x178] sm:$0xff]
    %v83 = vld [vmem:[%s3] sm:$0x1]
    %v84 = vld [vmem:[%s3 + $0x1] sm:$0x1]
    %v85 = vld [vmem:[%s3 + $0x2] sm:$0x1]
    %v86 = vld [vmem:[%s3 + $0x3] sm:$0x1]
    %v87 = vld [vmem:[%s3 + $0x4] sm:$0x1]
    %v88 = vld [vmem:[%s3 + $0x5] sm:$0x1]
    %v89 = vld [vmem:[%s3 + $0x6] sm:$0x1]
    %v90 = vld [vmem:[%s3 + $0x7] sm:$0x1]
    %v91 = vld [vmem:[%s3 + $0x8] sm:$0x1]
    %v92 = vld [vmem:[%s3 + $0x9] sm:$0x1]
    %v93 = vld [vmem:[%s3 + $0xa] sm:$0x1]
    %v94 = vld [vmem:[%s3 + $0xb] sm:$0x1]
    %v99 = vperm.slane %v83, 0
    %v100 = vperm.slane %v84, 0
    %v101 = vperm.slane %v85, 0
    %v102 = vperm.slane %v86, 0
    %vm107 = vcmask 261120
    %v109 = vsel %vm107, %v33, 0
    %111 = vmatpush.msra.mxu0 0.0
    %112 = vmatpush.msra.mxu0 0.0
    %113 = vmatpush.msra.mxu0 0.0
    %114 = vmatpush.msra.mxu0 0.0
    %115 = vmatpush.msra.mxu0 0.0
    %116 = vmatpush.msra.mxu0 0.0
    %117 = vmatpush.msra.mxu0 0.0
    %118 = vmatpush.msra.mxu0 0.0
    %119 = vmatpush.msra.mxu0 0.0
    %120 = vmatpush.msra.mxu0 0.0
    %121 = vmatpush.msra.mxu0 0.0
    %122 = vmatpush.msra.mxu0 0.0
    %123 = vmatpush.msra.mxu0 %v38
    %124 = vmatpush.msra.mxu0 %v37
    %125 = vmatpush.msra.mxu0 %v36
    %126 = vmatpush.msra.mxu0 %v35
    %127 = vmatmul.f32.gmra.mxu0 %v109
    %v128 = vpop.f32.mrf.mxu0
    %v129 = vadd.f32 %v99, %v128
    %130 = vdwg.mxu0
    %131 = vmatpush.msra.mxu0 0.0
    %132 = vmatpush.msra.mxu0 0.0
    %133 = vmatpush.msra.mxu0 0.0
    %134 = vmatpush.msra.mxu0 0.0
    %135 = vmatpush.msra.mxu0 0.0
    %136 = vmatpush.msra.mxu0 0.0
    %137 = vmatpush.msra.mxu0 0.0
    %138 = vmatpush.msra.mxu0 0.0
    %139 = vmatpush.msra.mxu0 0.0
    %140 = vmatpush.msra.mxu0 0.0
    %141 = vmatpush.msra.mxu0 0.0
    %142 = vmatpush.msra.mxu0 0.0
    %143 = vmatpush.msra.mxu0 %v42
    %144 = vmatpush.msra.mxu0 %v41
    %145 = vmatpush.msra.mxu0 %v40
    %146 = vmatpush.msra.mxu0 %v39
    %147 = vmatmul.f32.gmra.mxu0 %v109
    %v148 = vpop.f32.mrf.mxu0
    %v149 = vadd.f32 %v100, %v148
    %150 = vdwg.mxu0
    %151 = vmatpush.msra.mxu0 0.0
    %152 = vmatpush.msra.mxu0 0.0
    %153 = vmatpush.msra.mxu0 0.0
    %154 = vmatpush.msra.mxu0 0.0
    %155 = vmatpush.msra.mxu0 0.0
    %156 = vmatpush.msra.mxu0 0.0
    %157 = vmatpush.msra.mxu0 0.0
    %158 = vmatpush.msra.mxu0 0.0
    %159 = vmatpush.msra.mxu0 0.0
    %160 = vmatpush.msra.mxu0 0.0
    %161 = vmatpush.msra.mxu0 0.0
    %162 = vmatpush.msra.mxu0 0.0
    %163 = vmatpush.msra.mxu0 %v46
    %164 = vmatpush.msra.mxu0 %v45
    %165 = vmatpush.msra.mxu0 %v44
    %166 = vmatpush.msra.mxu0 %v43
    %167 = vmatmul.f32.gmra.mxu0 %v109
    %v168 = vpop.f32.mrf.mxu0
    %v169 = vadd.f32 %v101, %v168
    %170 = vdwg.mxu0
    %171 = vmatpush.msra.mxu0 0.0
    %172 = vmatpush.msra.mxu0 0.0
    %173 = vmatpush.msra.mxu0 0.0
    %174 = vmatpush.msra.mxu0 0.0
    %175 = vmatpush.msra.mxu0 0.0
    %176 = vmatpush.msra.mxu0 0.0
    %177 = vmatpush.msra.mxu0 0.0
    %178 = vmatpush.msra.mxu0 0.0
    %179 = vmatpush.msra.mxu0 0.0
    %180 = vmatpush.msra.mxu0 0.0
    %181 = vmatpush.msra.mxu0 0.0
    %182 = vmatpush.msra.mxu0 0.0
    %183 = vmatpush.msra.mxu0 %v50
    %184 = vmatpush.msra.mxu0 %v49
    %185 = vmatpush.msra.mxu0 %v48
    %186 = vmatpush.msra.mxu0 %v47
    %187 = vmatmul.f32.gmra.mxu0 %v109
    %v188 = vpop.f32.mrf.mxu0
    %v189 = vadd.f32 %v102, %v188
    %190 = vdwg.mxu0
    %v192 = vsel %vm107, %v34, 0
    %194 = vmatpush.msra.mxu0 0.0
    %195 = vmatpush.msra.mxu0 0.0
    %196 = vmatpush.msra.mxu0 0.0
    %197 = vmatpush.msra.mxu0 0.0
    %198 = vmatpush.msra.mxu0 0.0
    %199 = vmatpush.msra.mxu0 0.0
    %200 = vmatpush.msra.mxu0 0.0
    %201 = vmatpush.msra.mxu0 0.0
    %202 = vmatpush.msra.mxu0 0.0
    %203 = vmatpush.msra.mxu0 0.0
    %204 = vmatpush.msra.mxu0 0.0
    %205 = vmatpush.msra.mxu0 0.0
    %206 = vmatpush.msra.mxu0 %v38
    %207 = vmatpush.msra.mxu0 %v37
    %208 = vmatpush.msra.mxu0 %v36
    %209 = vmatpush.msra.mxu0 %v35
    %210 = vmatmul.f32.gmra.mxu0 %v192
    %v211 = vpop.f32.mrf.mxu0
    %v212 = vadd.f32 %v99, %v211
    %213 = vdwg.mxu0
    %214 = vmatpush.msra.mxu0 0.0
    %215 = vmatpush.msra.mxu0 0.0
    %216 = vmatpush.msra.mxu0 0.0
    %217 = vmatpush.msra.mxu0 0.0
    %218 = vmatpush.msra.mxu0 0.0
    %219 = vmatpush.msra.mxu0 0.0
    %220 = vmatpush.msra.mxu0 0.0
    %221 = vmatpush.msra.mxu0 0.0
    %222 = vmatpush.msra.mxu0 0.0
    %223 = vmatpush.msra.mxu0 0.0
    %224 = vmatpush.msra.mxu0 0.0
    %225 = vmatpush.msra.mxu0 0.0
    %226 = vmatpush.msra.mxu0 %v42
    %227 = vmatpush.msra.mxu0 %v41
    %228 = vmatpush.msra.mxu0 %v40
    %229 = vmatpush.msra.mxu0 %v39
    %230 = vmatmul.f32.gmra.mxu0 %v192
    %v231 = vpop.f32.mrf.mxu0
    %v232 = vadd.f32 %v100, %v231
    %233 = vdwg.mxu0
    %234 = vmatpush.msra.mxu0 0.0
    %235 = vmatpush.msra.mxu0 0.0
    %236 = vmatpush.msra.mxu0 0.0
    %237 = vmatpush.msra.mxu0 0.0
    %238 = vmatpush.msra.mxu0 0.0
    %239 = vmatpush.msra.mxu0 0.0
    %240 = vmatpush.msra.mxu0 0.0
    %241 = vmatpush.msra.mxu0 0.0
    %242 = vmatpush.msra.mxu0 0.0
    %243 = vmatpush.msra.mxu0 0.0
    %244 = vmatpush.msra.mxu0 0.0
    %245 = vmatpush.msra.mxu0 0.0
    %246 = vmatpush.msra.mxu0 %v46
    %247 = vmatpush.msra.mxu0 %v45
    %248 = vmatpush.msra.mxu0 %v44
    %249 = vmatpush.msra.mxu0 %v43
    %250 = vmatmul.f32.gmra.mxu0 %v192
    %v251 = vpop.f32.mrf.mxu0
    %v252 = vadd.f32 %v101, %v251
    %253 = vdwg.mxu0
    %254 = vmatpush.msra.mxu0 0.0
    %255 = vmatpush.msra.mxu0 0.0
    %256 = vmatpush.msra.mxu0 0.0
    %257 = vmatpush.msra.mxu0 0.0
    %258 = vmatpush.msra.mxu0 0.0
    %259 = vmatpush.msra.mxu0 0.0
    %260 = vmatpush.msra.mxu0 0.0
    %261 = vmatpush.msra.mxu0 0.0
    %262 = vmatpush.msra.mxu0 0.0
    %263 = vmatpush.msra.mxu0 0.0
    %264 = vmatpush.msra.mxu0 0.0
    %265 = vmatpush.msra.mxu0 0.0
    %266 = vmatpush.msra.mxu0 %v50
    %267 = vmatpush.msra.mxu0 %v49
    %268 = vmatpush.msra.mxu0 %v48
    %269 = vmatpush.msra.mxu0 %v47
    %270 = vmatmul.f32.gmra.mxu0 %v192
    %v271 = vpop.f32.mrf.mxu0
    %v272 = vadd.f32 %v102, %v271
    %273 = vdwg.mxu0
    %v278 = vperm.slane %v87, 0
    %v279 = vperm.slane %v88, 0
    %v280 = vperm.slane %v89, 0
    %v281 = vperm.slane %v90, 0
    %286 = vmatpush.msra.mxu0 0.0
    %287 = vmatpush.msra.mxu0 0.0
    %288 = vmatpush.msra.mxu0 0.0
    %289 = vmatpush.msra.mxu0 0.0
    %290 = vmatpush.msra.mxu0 0.0
    %291 = vmatpush.msra.mxu0 0.0
    %292 = vmatpush.msra.mxu0 0.0
    %293 = vmatpush.msra.mxu0 0.0
    %294 = vmatpush.msra.mxu0 0.0
    %295 = vmatpush.msra.mxu0 0.0
    %296 = vmatpush.msra.mxu0 0.0
    %297 = vmatpush.msra.mxu0 0.0
    %298 = vmatpush.msra.mxu0 %v54
    %299 = vmatpush.msra.mxu0 %v53
    %300 = vmatpush.msra.mxu0 %v52
    %301 = vmatpush.msra.mxu0 %v51
    %302 = vmatmul.f32.gmra.mxu0 %v109
    %v303 = vpop.f32.mrf.mxu0
    %v304 = vadd.f32 %v278, %v303
    %305 = vdwg.mxu0
    %306 = vmatpush.msra.mxu0 0.0
    %307 = vmatpush.msra.mxu0 0.0
    %308 = vmatpush.msra.mxu0 0.0
    %309 = vmatpush.msra.mxu0 0.0
    %310 = vmatpush.msra.mxu0 0.0
    %311 = vmatpush.msra.mxu0 0.0
    %312 = vmatpush.msra.mxu0 0.0
    %313 = vmatpush.msra.mxu0 0.0
    %314 = vmatpush.msra.mxu0 0.0
    %315 = vmatpush.msra.mxu0 0.0
    %316 = vmatpush.msra.mxu0 0.0
    %317 = vmatpush.msra.mxu0 0.0
    %318 = vmatpush.msra.mxu0 %v58
    %319 = vmatpush.msra.mxu0 %v57
    %320 = vmatpush.msra.mxu0 %v56
    %321 = vmatpush.msra.mxu0 %v55
    %322 = vmatmul.f32.gmra.mxu0 %v109
    %v323 = vpop.f32.mrf.mxu0
    %v324 = vadd.f32 %v279, %v323
    %325 = vdwg.mxu0
    %326 = vmatpush.msra.mxu0 0.0
    %327 = vmatpush.msra.mxu0 0.0
    %328 = vmatpush.msra.mxu0 0.0
    %329 = vmatpush.msra.mxu0 0.0
    %330 = vmatpush.msra.mxu0 0.0
    %331 = vmatpush.msra.mxu0 0.0
    %332 = vmatpush.msra.mxu0 0.0
    %333 = vmatpush.msra.mxu0 0.0
    %334 = vmatpush.msra.mxu0 0.0
    %335 = vmatpush.msra.mxu0 0.0
    %336 = vmatpush.msra.mxu0 0.0
    %337 = vmatpush.msra.mxu0 0.0
    %338 = vmatpush.msra.mxu0 %v62
    %339 = vmatpush.msra.mxu0 %v61
    %340 = vmatpush.msra.mxu0 %v60
    %341 = vmatpush.msra.mxu0 %v59
    %342 = vmatmul.f32.gmra.mxu0 %v109
    %v343 = vpop.f32.mrf.mxu0
    %v344 = vadd.f32 %v280, %v343
    %345 = vdwg.mxu0
    %346 = vmatpush.msra.mxu0 0.0
    %347 = vmatpush.msra.mxu0 0.0
    %348 = vmatpush.msra.mxu0 0.0
    %349 = vmatpush.msra.mxu0 0.0
    %350 = vmatpush.msra.mxu0 0.0
    %351 = vmatpush.msra.mxu0 0.0
    %352 = vmatpush.msra.mxu0 0.0
    %353 = vmatpush.msra.mxu0 0.0
    %354 = vmatpush.msra.mxu0 0.0
    %355 = vmatpush.msra.mxu0 0.0
    %356 = vmatpush.msra.mxu0 0.0
    %357 = vmatpush.msra.mxu0 0.0
    %358 = vmatpush.msra.mxu0 %v66
    %359 = vmatpush.msra.mxu0 %v65
    %360 = vmatpush.msra.mxu0 %v64
    %361 = vmatpush.msra.mxu0 %v63
    %362 = vmatmul.f32.gmra.mxu0 %v109
    %v363 = vpop.f32.mrf.mxu0
    %v364 = vadd.f32 %v281, %v363
    %365 = vdwg.mxu0
    %366 = vmatpush.msra.mxu0 0.0
    %367 = vmatpush.msra.mxu0 0.0
    %368 = vmatpush.msra.mxu0 0.0
    %369 = vmatpush.msra.mxu0 0.0
    %370 = vmatpush.msra.mxu0 0.0
    %371 = vmatpush.msra.mxu0 0.0
    %372 = vmatpush.msra.mxu0 0.0
    %373 = vmatpush.msra.mxu0 0.0
    %374 = vmatpush.msra.mxu0 0.0
    %375 = vmatpush.msra.mxu0 0.0
    %376 = vmatpush.msra.mxu0 0.0
    %377 = vmatpush.msra.mxu0 0.0
    %378 = vmatpush.msra.mxu0 %v54
    %379 = vmatpush.msra.mxu0 %v53
    %380 = vmatpush.msra.mxu0 %v52
    %381 = vmatpush.msra.mxu0 %v51
    %382 = vmatmul.f32.gmra.mxu0 %v192
    %v383 = vpop.f32.mrf.mxu0
    %v384 = vadd.f32 %v278, %v383
    %385 = vdwg.mxu0
    %386 = vmatpush.msra.mxu0 0.0
    %387 = vmatpush.msra.mxu0 0.0
    %388 = vmatpush.msra.mxu0 0.0
    %389 = vmatpush.msra.mxu0 0.0
    %390 = vmatpush.msra.mxu0 0.0
    %391 = vmatpush.msra.mxu0 0.0
    %392 = vmatpush.msra.mxu0 0.0
    %393 = vmatpush.msra.mxu0 0.0
    %394 = vmatpush.msra.mxu0 0.0
    %395 = vmatpush.msra.mxu0 0.0
    %396 = vmatpush.msra.mxu0 0.0
    %397 = vmatpush.msra.mxu0 0.0
    %398 = vmatpush.msra.mxu0 %v58
    %399 = vmatpush.msra.mxu0 %v57
    %400 = vmatpush.msra.mxu0 %v56
    %401 = vmatpush.msra.mxu0 %v55
    %402 = vmatmul.f32.gmra.mxu0 %v192
    %v403 = vpop.f32.mrf.mxu0
    %v404 = vadd.f32 %v279, %v403
    %405 = vdwg.mxu0
    %406 = vmatpush.msra.mxu0 0.0
    %407 = vmatpush.msra.mxu0 0.0
    %408 = vmatpush.msra.mxu0 0.0
    %409 = vmatpush.msra.mxu0 0.0
    %410 = vmatpush.msra.mxu0 0.0
    %411 = vmatpush.msra.mxu0 0.0
    %412 = vmatpush.msra.mxu0 0.0
    %413 = vmatpush.msra.mxu0 0.0
    %414 = vmatpush.msra.mxu0 0.0
    %415 = vmatpush.msra.mxu0 0.0
    %416 = vmatpush.msra.mxu0 0.0
    %417 = vmatpush.msra.mxu0 0.0
    %418 = vmatpush.msra.mxu0 %v62
    %419 = vmatpush.msra.mxu0 %v61
    %420 = vmatpush.msra.mxu0 %v60
    %421 = vmatpush.msra.mxu0 %v59
    %422 = vmatmul.f32.gmra.mxu0 %v192
    %v423 = vpop.f32.mrf.mxu0
    %v424 = vadd.f32 %v280, %v423
    %425 = vdwg.mxu0
    %426 = vmatpush.msra.mxu0 0.0
    %427 = vmatpush.msra.mxu0 0.0
    %428 = vmatpush.msra.mxu0 0.0
    %429 = vmatpush.msra.mxu0 0.0
    %430 = vmatpush.msra.mxu0 0.0
    %431 = vmatpush.msra.mxu0 0.0
    %432 = vmatpush.msra.mxu0 0.0
    %433 = vmatpush.msra.mxu0 0.0
    %434 = vmatpush.msra.mxu0 0.0
    %435 = vmatpush.msra.mxu0 0.0
    %436 = vmatpush.msra.mxu0 0.0
    %437 = vmatpush.msra.mxu0 0.0
    %438 = vmatpush.msra.mxu0 %v66
    %439 = vmatpush.msra.mxu0 %v65
    %440 = vmatpush.msra.mxu0 %v64
    %441 = vmatpush.msra.mxu0 %v63
    %442 = vmatmul.f32.gmra.mxu0 %v192
    %v443 = vpop.f32.mrf.mxu0
    %v444 = vadd.f32 %v281, %v443
    %445 = vdwg.mxu0
    %v450 = vperm.slane %v91, 0
    %v451 = vperm.slane %v92, 0
    %v452 = vperm.slane %v93, 0
    %v453 = vperm.slane %v94, 0
    %458 = vmatpush.msra.mxu0 0.0
    %459 = vmatpush.msra.mxu0 0.0
    %460 = vmatpush.msra.mxu0 0.0
    %461 = vmatpush.msra.mxu0 0.0
    %462 = vmatpush.msra.mxu0 0.0
    %463 = vmatpush.msra.mxu0 0.0
    %464 = vmatpush.msra.mxu0 0.0
    %465 = vmatpush.msra.mxu0 0.0
    %466 = vmatpush.msra.mxu0 0.0
    %467 = vmatpush.msra.mxu0 0.0
    %468 = vmatpush.msra.mxu0 0.0
    %469 = vmatpush.msra.mxu0 0.0
    %470 = vmatpush.msra.mxu0 %v70
    %471 = vmatpush.msra.mxu0 %v69
    %472 = vmatpush.msra.mxu0 %v68
    %473 = vmatpush.msra.mxu0 %v67
    %474 = vmatmul.f32.gmra.mxu0 %v109
    %v475 = vpop.f32.mrf.mxu0
    %v476 = vadd.f32 %v450, %v475
    %477 = vdwg.mxu0
    %478 = vmatpush.msra.mxu0 0.0
    %479 = vmatpush.msra.mxu0 0.0
    %480 = vmatpush.msra.mxu0 0.0
    %481 = vmatpush.msra.mxu0 0.0
    %482 = vmatpush.msra.mxu0 0.0
    %483 = vmatpush.msra.mxu0 0.0
    %484 = vmatpush.msra.mxu0 0.0
    %485 = vmatpush.msra.mxu0 0.0
    %486 = vmatpush.msra.mxu0 0.0
    %487 = vmatpush.msra.mxu0 0.0
    %488 = vmatpush.msra.mxu0 0.0
    %489 = vmatpush.msra.mxu0 0.0
    %490 = vmatpush.msra.mxu0 %v74
    %491 = vmatpush.msra.mxu0 %v73
    %492 = vmatpush.msra.mxu0 %v72
    %493 = vmatpush.msra.mxu0 %v71
    %494 = vmatmul.f32.gmra.mxu0 %v109
    %v495 = vpop.f32.mrf.mxu0
    %v496 = vadd.f32 %v451, %v495
    %497 = vdwg.mxu0
    %498 = vmatpush.msra.mxu0 0.0
    %499 = vmatpush.msra.mxu0 0.0
    %500 = vmatpush.msra.mxu0 0.0
    %501 = vmatpush.msra.mxu0 0.0
    %502 = vmatpush.msra.mxu0 0.0
    %503 = vmatpush.msra.mxu0 0.0
    %504 = vmatpush.msra.mxu0 0.0
    %505 = vmatpush.msra.mxu0 0.0
    %506 = vmatpush.msra.mxu0 0.0
    %507 = vmatpush.msra.mxu0 0.0
    %508 = vmatpush.msra.mxu0 0.0
    %509 = vmatpush.msra.mxu0 0.0
    %510 = vmatpush.msra.mxu0 %v78
    %511 = vmatpush.msra.mxu0 %v77
    %512 = vmatpush.msra.mxu0 %v76
    %513 = vmatpush.msra.mxu0 %v75
    %514 = vmatmul.f32.gmra.mxu0 %v109
    %v515 = vpop.f32.mrf.mxu0
    %v516 = vadd.f32 %v452, %v515
    %517 = vdwg.mxu0
    %518 = vmatpush.msra.mxu0 0.0
    %519 = vmatpush.msra.mxu0 0.0
    %520 = vmatpush.msra.mxu0 0.0
    %521 = vmatpush.msra.mxu0 0.0
    %522 = vmatpush.msra.mxu0 0.0
    %523 = vmatpush.msra.mxu0 0.0
    %524 = vmatpush.msra.mxu0 0.0
    %525 = vmatpush.msra.mxu0 0.0
    %526 = vmatpush.msra.mxu0 0.0
    %527 = vmatpush.msra.mxu0 0.0
    %528 = vmatpush.msra.mxu0 0.0
    %529 = vmatpush.msra.mxu0 0.0
    %530 = vmatpush.msra.mxu0 %v82
    %531 = vmatpush.msra.mxu0 %v81
    %532 = vmatpush.msra.mxu0 %v80
    %533 = vmatpush.msra.mxu0 %v79
    %534 = vmatmul.f32.gmra.mxu0 %v109
    %v535 = vpop.f32.mrf.mxu0
    %v536 = vadd.f32 %v453, %v535
    %537 = vdwg.mxu0
    %538 = vmatpush.msra.mxu0 0.0
    %539 = vmatpush.msra.mxu0 0.0
    %540 = vmatpush.msra.mxu0 0.0
    %541 = vmatpush.msra.mxu0 0.0
    %542 = vmatpush.msra.mxu0 0.0
    %543 = vmatpush.msra.mxu0 0.0
    %544 = vmatpush.msra.mxu0 0.0
    %545 = vmatpush.msra.mxu0 0.0
    %546 = vmatpush.msra.mxu0 0.0
    %547 = vmatpush.msra.mxu0 0.0
    %548 = vmatpush.msra.mxu0 0.0
    %549 = vmatpush.msra.mxu0 0.0
    %550 = vmatpush.msra.mxu0 %v70
    %551 = vmatpush.msra.mxu0 %v69
    %552 = vmatpush.msra.mxu0 %v68
    %553 = vmatpush.msra.mxu0 %v67
    %554 = vmatmul.f32.gmra.mxu0 %v192
    %v555 = vpop.f32.mrf.mxu0
    %v556 = vadd.f32 %v450, %v555
    %557 = vdwg.mxu0
    %558 = vmatpush.msra.mxu0 0.0
    %559 = vmatpush.msra.mxu0 0.0
    %560 = vmatpush.msra.mxu0 0.0
    %561 = vmatpush.msra.mxu0 0.0
    %562 = vmatpush.msra.mxu0 0.0
    %563 = vmatpush.msra.mxu0 0.0
    %564 = vmatpush.msra.mxu0 0.0
    %565 = vmatpush.msra.mxu0 0.0
    %566 = vmatpush.msra.mxu0 0.0
    %567 = vmatpush.msra.mxu0 0.0
    %568 = vmatpush.msra.mxu0 0.0
    %569 = vmatpush.msra.mxu0 0.0
    %570 = vmatpush.msra.mxu0 %v74
    %571 = vmatpush.msra.mxu0 %v73
    %572 = vmatpush.msra.mxu0 %v72
    %573 = vmatpush.msra.mxu0 %v71
    %574 = vmatmul.f32.gmra.mxu0 %v192
    %v575 = vpop.f32.mrf.mxu0
    %v576 = vadd.f32 %v451, %v575
    %577 = vdwg.mxu0
    %578 = vmatpush.msra.mxu0 0.0
    %579 = vmatpush.msra.mxu0 0.0
    %580 = vmatpush.msra.mxu0 0.0
    %581 = vmatpush.msra.mxu0 0.0
    %582 = vmatpush.msra.mxu0 0.0
    %583 = vmatpush.msra.mxu0 0.0
    %584 = vmatpush.msra.mxu0 0.0
    %585 = vmatpush.msra.mxu0 0.0
    %586 = vmatpush.msra.mxu0 0.0
    %587 = vmatpush.msra.mxu0 0.0
    %588 = vmatpush.msra.mxu0 0.0
    %589 = vmatpush.msra.mxu0 0.0
    %590 = vmatpush.msra.mxu0 %v78
    %591 = vmatpush.msra.mxu0 %v77
    %592 = vmatpush.msra.mxu0 %v76
    %593 = vmatpush.msra.mxu0 %v75
    %594 = vmatmul.f32.gmra.mxu0 %v192
    %v595 = vpop.f32.mrf.mxu0
    %v596 = vadd.f32 %v452, %v595
    %597 = vdwg.mxu0
    %598 = vmatpush.msra.mxu0 0.0
    %599 = vmatpush.msra.mxu0 0.0
    %600 = vmatpush.msra.mxu0 0.0
    %601 = vmatpush.msra.mxu0 0.0
    %602 = vmatpush.msra.mxu0 0.0
    %603 = vmatpush.msra.mxu0 0.0
    %604 = vmatpush.msra.mxu0 0.0
    %605 = vmatpush.msra.mxu0 0.0
    %606 = vmatpush.msra.mxu0 0.0
    %607 = vmatpush.msra.mxu0 0.0
    %608 = vmatpush.msra.mxu0 0.0
    %609 = vmatpush.msra.mxu0 0.0
    %610 = vmatpush.msra.mxu0 %v82
    %611 = vmatpush.msra.mxu0 %v81
    %612 = vmatpush.msra.mxu0 %v80
    %613 = vmatpush.msra.mxu0 %v79
    %614 = vmatmul.f32.gmra.mxu0 %v192
    %v615 = vpop.f32.mrf.mxu0
    %v616 = vadd.f32 %v453, %v615
    %617 = vdwg.mxu0
    %v618 = vld [vmem:[%s1] sm:$0x3]
    %v619 = vsub.f32 1.0, %v618
    %v620 = vmul.f32 %v619, -10000.0
    %v622 = vrot.slane %v620, 1
    %v623 = vperm.slane %v620, 0
    %v624 = vperm.slane %v622, 0
    %vm627 = vcmask 64512
    %v629 = vsel %vm627, %v129, 0
    %v632 = vsel %vm627, %v304, 0
    %634 = vmatpush.xpose.msra.mxu0 0.0
    %635 = vmatpush.xpose.msra.mxu0 0.0
    %636 = vmatpush.xpose.msra.mxu0 0.0
    %637 = vmatpush.xpose.msra.mxu0 0.0
    %638 = vmatpush.xpose.msra.mxu0 0.0
    %639 = vmatpush.xpose.msra.mxu0 0.0
    %640 = vmatpush.xpose.msra.mxu0 0.0
    %641 = vmatpush.xpose.msra.mxu0 0.0
    %642 = vmatpush.xpose.msra.mxu0 0.0
    %643 = vmatpush.xpose.msra.mxu0 0.0
    %644 = vmatpush.xpose.msra.mxu0 0.0
    %645 = vmatpush.xpose.msra.mxu0 0.0
    %646 = vmatpush.xpose.msra.mxu0 0.0
    %647 = vmatpush.xpose.msra.mxu0 0.0
    %648 = vmatpush.xpose.msra.mxu0 0.0
    %649 = vmatpush.xpose.msra.mxu0 %v632
    %650 = vmatmul.f32.gmra.mxu0 %v629
    %v651 = vpop.f32.mrf.mxu0
    %v652 = vadd.f32 0.0, %v651
    %653 = vdwg.mxu0
    %v655 = vsel %vm627, %v149, 0
    %v658 = vsel %vm627, %v324, 0
    %660 = vmatpush.xpose.msra.mxu0 0.0
    %661 = vmatpush.xpose.msra.mxu0 0.0
    %662 = vmatpush.xpose.msra.mxu0 0.0
    %663 = vmatpush.xpose.msra.mxu0 0.0
    %664 = vmatpush.xpose.msra.mxu0 0.0
    %665 = vmatpush.xpose.msra.mxu0 0.0
    %666 = vmatpush.xpose.msra.mxu0 0.0
    %667 = vmatpush.xpose.msra.mxu0 0.0
    %668 = vmatpush.xpose.msra.mxu0 0.0
    %669 = vmatpush.xpose.msra.mxu0 0.0
    %670 = vmatpush.xpose.msra.mxu0 0.0
    %671 = vmatpush.xpose.msra.mxu0 0.0
    %672 = vmatpush.xpose.msra.mxu0 0.0
    %673 = vmatpush.xpose.msra.mxu0 0.0
    %674 = vmatpush.xpose.msra.mxu0 0.0
    %675 = vmatpush.xpose.msra.mxu0 %v658
    %676 = vmatmul.f32.gmra.mxu0 %v655
    %v677 = vpop.f32.mrf.mxu0
    %v678 = vadd.f32 0.0, %v677
    %679 = vdwg.mxu0
    %v681 = vsel %vm627, %v169, 0
    %v684 = vsel %vm627, %v344, 0
    %686 = vmatpush.xpose.msra.mxu0 0.0
    %687 = vmatpush.xpose.msra.mxu0 0.0
    %688 = vmatpush.xpose.msra.mxu0 0.0
    %689 = vmatpush.xpose.msra.mxu0 0.0
    %690 = vmatpush.xpose.msra.mxu0 0.0
    %691 = vmatpush.xpose.msra.mxu0 0.0
    %692 = vmatpush.xpose.msra.mxu0 0.0
    %693 = vmatpush.xpose.msra.mxu0 0.0
    %694 = vmatpush.xpose.msra.mxu0 0.0
    %695 = vmatpush.xpose.msra.mxu0 0.0
    %696 = vmatpush.xpose.msra.mxu0 0.0
    %697 = vmatpush.xpose.msra.mxu0 0.0
    %698 = vmatpush.xpose.msra.mxu0 0.0
    %699 = vmatpush.xpose.msra.mxu0 0.0
    %700 = vmatpush.xpose.msra.mxu0 0.0
    %701 = vmatpush.xpose.msra.mxu0 %v684
    %702 = vmatmul.f32.gmra.mxu0 %v681
    %v703 = vpop.f32.mrf.mxu0
    %v704 = vadd.f32 0.0, %v703
    %705 = vdwg.mxu0
    %v707 = vsel %vm627, %v189, 0
    %v710 = vsel %vm627, %v364, 0
    %712 = vmatpush.xpose.msra.mxu0 0.0
    %713 = vmatpush.xpose.msra.mxu0 0.0
    %714 = vmatpush.xpose.msra.mxu0 0.0
    %715 = vmatpush.xpose.msra.mxu0 0.0
    %716 = vmatpush.xpose.msra.mxu0 0.0
    %717 = vmatpush.xpose.msra.mxu0 0.0
    %718 = vmatpush.xpose.msra.mxu0 0.0
    %719 = vmatpush.xpose.msra.mxu0 0.0
    %720 = vmatpush.xpose.msra.mxu0 0.0
    %721 = vmatpush.xpose.msra.mxu0 0.0
    %722 = vmatpush.xpose.msra.mxu0 0.0
    %723 = vmatpush.xpose.msra.mxu0 0.0
    %724 = vmatpush.xpose.msra.mxu0 0.0
    %725 = vmatpush.xpose.msra.mxu0 0.0
    %726 = vmatpush.xpose.msra.mxu0 0.0
    %727 = vmatpush.xpose.msra.mxu0 %v710
    %728 = vmatmul.f32.gmra.mxu0 %v707
    %v729 = vpop.f32.mrf.mxu0
    %v730 = vadd.f32 0.0, %v729
    %731 = vdwg.mxu0
    %v733 = vsel %vm627, %v212, 0
    %v736 = vsel %vm627, %v384, 0
    %738 = vmatpush.xpose.msra.mxu0 0.0
    %739 = vmatpush.xpose.msra.mxu0 0.0
    %740 = vmatpush.xpose.msra.mxu0 0.0
    %741 = vmatpush.xpose.msra.mxu0 0.0
    %742 = vmatpush.xpose.msra.mxu0 0.0
    %743 = vmatpush.xpose.msra.mxu0 0.0
    %744 = vmatpush.xpose.msra.mxu0 0.0
    %745 = vmatpush.xpose.msra.mxu0 0.0
    %746 = vmatpush.xpose.msra.mxu0 0.0
    %747 = vmatpush.xpose.msra.mxu0 0.0
    %748 = vmatpush.xpose.msra.mxu0 0.0
    %749 = vmatpush.xpose.msra.mxu0 0.0
    %750 = vmatpush.xpose.msra.mxu0 0.0
    %751 = vmatpush.xpose.msra.mxu0 0.0
    %752 = vmatpush.xpose.msra.mxu0 0.0
    %753 = vmatpush.xpose.msra.mxu0 %v736
    %754 = vmatmul.f32.gmra.mxu0 %v733
    %v755 = vpop.f32.mrf.mxu0
    %v756 = vadd.f32 0.0, %v755
    %757 = vdwg.mxu0
    %v759 = vsel %vm627, %v232, 0
    %v762 = vsel %vm627, %v404, 0
    %764 = vmatpush.xpose.msra.mxu0 0.0
    %765 = vmatpush.xpose.msra.mxu0 0.0
    %766 = vmatpush.xpose.msra.mxu0 0.0
    %767 = vmatpush.xpose.msra.mxu0 0.0
    %768 = vmatpush.xpose.msra.mxu0 0.0
    %769 = vmatpush.xpose.msra.mxu0 0.0
    %770 = vmatpush.xpose.msra.mxu0 0.0
    %771 = vmatpush.xpose.msra.mxu0 0.0
    %772 = vmatpush.xpose.msra.mxu0 0.0
    %773 = vmatpush.xpose.msra.mxu0 0.0
    %774 = vmatpush.xpose.msra.mxu0 0.0
    %775 = vmatpush.xpose.msra.mxu0 0.0
    %776 = vmatpush.xpose.msra.mxu0 0.0
    %777 = vmatpush.xpose.msra.mxu0 0.0
    %778 = vmatpush.xpose.msra.mxu0 0.0
    %779 = vmatpush.xpose.msra.mxu0 %v762
    %780 = vmatmul.f32.gmra.mxu0 %v759
    %v781 = vpop.f32.mrf.mxu0
    %v782 = vadd.f32 0.0, %v781
    %783 = vdwg.mxu0
    %v785 = vsel %vm627, %v252, 0
    %v788 = vsel %vm627, %v424, 0
    %790 = vmatpush.xpose.msra.mxu0 0.0
    %791 = vmatpush.xpose.msra.mxu0 0.0
    %792 = vmatpush.xpose.msra.mxu0 0.0
    %793 = vmatpush.xpose.msra.mxu0 0.0
    %794 = vmatpush.xpose.msra.mxu0 0.0
    %795 = vmatpush.xpose.msra.mxu0 0.0
    %796 = vmatpush.xpose.msra.mxu0 0.0
    %797 = vmatpush.xpose.msra.mxu0 0.0
    %798 = vmatpush.xpose.msra.mxu0 0.0
    %799 = vmatpush.xpose.msra.mxu0 0.0
    %800 = vmatpush.xpose.msra.mxu0 0.0
    %801 = vmatpush.xpose.msra.mxu0 0.0
    %802 = vmatpush.xpose.msra.mxu0 0.0
    %803 = vmatpush.xpose.msra.mxu0 0.0
    %804 = vmatpush.xpose.msra.mxu0 0.0
    %805 = vmatpush.xpose.msra.mxu0 %v788
    %806 = vmatmul.f32.gmra.mxu0 %v785
    %v807 = vpop.f32.mrf.mxu0
    %v808 = vadd.f32 0.0, %v807
    %809 = vdwg.mxu0
    %v811 = vsel %vm627, %v272, 0
    %v814 = vsel %vm627, %v444, 0
    %816 = vmatpush.xpose.msra.mxu0 0.0
    %817 = vmatpush.xpose.msra.mxu0 0.0
    %818 = vmatpush.xpose.msra.mxu0 0.0
    %819 = vmatpush.xpose.msra.mxu0 0.0
    %820 = vmatpush.xpose.msra.mxu0 0.0
    %821 = vmatpush.xpose.msra.mxu0 0.0
    %822 = vmatpush.xpose.msra.mxu0 0.0
    %823 = vmatpush.xpose.msra.mxu0 0.0
    %824 = vmatpush.xpose.msra.mxu0 0.0
    %825 = vmatpush.xpose.msra.mxu0 0.0
    %826 = vmatpush.xpose.msra.mxu0 0.0
    %827 = vmatpush.xpose.msra.mxu0 0.0
    %828 = vmatpush.xpose.msra.mxu0 0.0
    %829 = vmatpush.xpose.msra.mxu0 0.0
    %830 = vmatpush.xpose.msra.mxu0 0.0
    %831 = vmatpush.xpose.msra.mxu0 %v814
    %832 = vmatmul.f32.gmra.mxu0 %v811
    %v833 = vpop.f32.mrf.mxu0
    %v834 = vadd.f32 0.0, %v833
    %835 = vdwg.mxu0
    %v836 = vmul.f32 %v652, 0.35355338
    %v837 = vmul.f32 %v678, 0.35355338
    %v838 = vmul.f32 %v704, 0.35355338
    %v839 = vmul.f32 %v730, 0.35355338
    %v840 = vmul.f32 %v756, 0.35355338
    %v841 = vmul.f32 %v782, 0.35355338
    %v842 = vmul.f32 %v808, 0.35355338
    %v843 = vmul.f32 %v834, 0.35355338
    %v844 = vadd.f32 %v836, %v623
    %v845 = vadd.f32 %v837, %v623
    %v846 = vadd.f32 %v838, %v623
    %v847 = vadd.f32 %v839, %v623
    %v848 = vadd.f32 %v840, %v624
    %v849 = vadd.f32 %v841, %v624
    %v850 = vadd.f32 %v842, %v624
    %v851 = vadd.f32 %v843, %v624
    %v852 = vsel %vm627, %v844, -inf
    %853 = vmax.xlane.f32.xlu0 %v852
    %v854 = vpop.xlane.xlu0 %853
    %v855 = vsel %vm627, %v845, -inf
    %856 = vmax.xlane.f32.xlu0 %v855
    %v857 = vpop.xlane.xlu0 %856
    %v858 = vsel %vm627, %v846, -inf
    %859 = vmax.xlane.f32.xlu0 %v858
    %v860 = vpop.xlane.xlu0 %859
    %v861 = vsel %vm627, %v847, -inf
    %862 = vmax.xlane.f32.xlu0 %v861
    %v863 = vpop.xlane.xlu0 %862
    %v864 = vsel %vm627, %v848, -inf
    %865 = vmax.xlane.f32.xlu0 %v864
    %v866 = vpop.xlane.xlu0 %865
    %v867 = vsel %vm627, %v849, -inf
    %868 = vmax.xlane.f32.xlu0 %v867
    %v869 = vpop.xlane.xlu0 %868
    %v870 = vsel %vm627, %v850, -inf
    %871 = vmax.xlane.f32.xlu0 %v870
    %v872 = vpop.xlane.xlu0 %871
    %v873 = vsel %vm627, %v851, -inf
    %874 = vmax.xlane.f32.xlu0 %v873
    %v875 = vpop.xlane.xlu0 %874
    %v876 = vsub.f32 %v844, %v854
    %v877 = vsub.f32 %v845, %v857
    %v878 = vsub.f32 %v846, %v860
    %v879 = vsub.f32 %v847, %v863
    %v880 = vsub.f32 %v848, %v866
    %v881 = vsub.f32 %v849, %v869
    %v882 = vsub.f32 %v850, %v872
    %v883 = vsub.f32 %v851, %v875
    %v884 = vmul.f32 %v876, 1.442695
    %v885 = vpow.pop %v884
    %v886 = vmul.f32 %v877, 1.442695
    %v887 = vpow.pop %v886
    %v888 = vmul.f32 %v878, 1.442695
    %v889 = vpow.pop %v888
    %v890 = vmul.f32 %v879, 1.442695
    %v891 = vpow.pop %v890
    %v892 = vmul.f32 %v880, 1.442695
    %v893 = vpow.pop %v892
    %v894 = vmul.f32 %v881, 1.442695
    %v895 = vpow.pop %v894
    %v896 = vmul.f32 %v882, 1.442695
    %v897 = vpow.pop %v896
    %v898 = vmul.f32 %v883, 1.442695
    %v899 = vpow.pop %v898
    %v900 = vsel %vm627, %v885, 0.0
    %901 = vadd.xlane.f32.xlu0 %v900
    %v902 = vpop.xlane.xlu0 %901
    %v903 = vsel %vm627, %v887, 0.0
    %904 = vadd.xlane.f32.xlu0 %v903
    %v905 = vpop.xlane.xlu0 %904
    %v906 = vsel %vm627, %v889, 0.0
    %907 = vadd.xlane.f32.xlu0 %v906
    %v908 = vpop.xlane.xlu0 %907
    %v909 = vsel %vm627, %v891, 0.0
    %910 = vadd.xlane.f32.xlu0 %v909
    %v911 = vpop.xlane.xlu0 %910
    %v912 = vsel %vm627, %v893, 0.0
    %913 = vadd.xlane.f32.xlu0 %v912
    %v914 = vpop.xlane.xlu0 %913
    %v915 = vsel %vm627, %v895, 0.0
    %916 = vadd.xlane.f32.xlu0 %v915
    %v917 = vpop.xlane.xlu0 %916
    %v918 = vsel %vm627, %v897, 0.0
    %919 = vadd.xlane.f32.xlu0 %v918
    %v920 = vpop.xlane.xlu0 %919
    %v921 = vsel %vm627, %v899, 0.0
    %922 = vadd.xlane.f32.xlu0 %v921
    %v923 = vpop.xlane.xlu0 %922
    %v924 = vrcp.pop %v902
    %v925 = vrcp.pop %v905
    %v926 = vrcp.pop %v908
    %v927 = vrcp.pop %v911
    %v928 = vrcp.pop %v914
    %v929 = vrcp.pop %v917
    %v930 = vrcp.pop %v920
    %v931 = vrcp.pop %v923
    %v932 = vmul.f32 %v885, %v924
    %v933 = vmul.f32 %v887, %v925
    %v934 = vmul.f32 %v889, %v926
    %v935 = vmul.f32 %v891, %v927
    %v936 = vmul.f32 %v893, %v928
    %v937 = vmul.f32 %v895, %v929
    %v938 = vmul.f32 %v897, %v930
    %v939 = vmul.f32 %v899, %v931
    %v941 = vsel %vm627, %v932, 0
    %943 = vmatpush.msra.mxu0 0.0
    %944 = vmatpush.msra.mxu0 0.0
    %945 = vmatpush.msra.mxu0 0.0
    %946 = vmatpush.msra.mxu0 0.0
    %947 = vmatpush.msra.mxu0 0.0
    %948 = vmatpush.msra.mxu0 0.0
    %949 = vmatpush.msra.mxu0 0.0
    %950 = vmatpush.msra.mxu0 0.0
    %951 = vmatpush.msra.mxu0 0.0
    %952 = vmatpush.msra.mxu0 0.0
    %953 = vmatpush.msra.mxu0 0.0
    %954 = vmatpush.msra.mxu0 0.0
    %955 = vmatpush.msra.mxu0 0.0
    %956 = vmatpush.msra.mxu0 0.0
    %957 = vmatpush.msra.mxu0 0.0
    %958 = vmatpush.msra.mxu0 %v476
    %959 = vmatmul.f32.gmra.mxu0 %v941
    %v960 = vpop.f32.mrf.mxu0
    %v961 = vadd.f32 0.0, %v960
    %962 = vdwg.mxu0
    %v964 = vsel %vm627, %v933, 0
    %966 = vmatpush.msra.mxu0 0.0
    %967 = vmatpush.msra.mxu0 0.0
    %968 = vmatpush.msra.mxu0 0.0
    %969 = vmatpush.msra.mxu0 0.0
    %970 = vmatpush.msra.mxu0 0.0
    %971 = vmatpush.msra.mxu0 0.0
    %972 = vmatpush.msra.mxu0 0.0
    %973 = vmatpush.msra.mxu0 0.0
    %974 = vmatpush.msra.mxu0 0.0
    %975 = vmatpush.msra.mxu0 0.0
    %976 = vmatpush.msra.mxu0 0.0
    %977 = vmatpush.msra.mxu0 0.0
    %978 = vmatpush.msra.mxu0 0.0
    %979 = vmatpush.msra.mxu0 0.0
    %980 = vmatpush.msra.mxu0 0.0
    %981 = vmatpush.msra.mxu0 %v496
    %982 = vmatmul.f32.gmra.mxu0 %v964
    %v983 = vpop.f32.mrf.mxu0
    %v984 = vadd.f32 0.0, %v983
    %985 = vdwg.mxu0
    %v987 = vsel %vm627, %v934, 0
    %989 = vmatpush.msra.mxu0 0.0
    %990 = vmatpush.msra.mxu0 0.0
    %991 = vmatpush.msra.mxu0 0.0
    %992 = vmatpush.msra.mxu0 0.0
    %993 = vmatpush.msra.mxu0 0.0
    %994 = vmatpush.msra.mxu0 0.0
    %995 = vmatpush.msra.mxu0 0.0
    %996 = vmatpush.msra.mxu0 0.0
    %997 = vmatpush.msra.mxu0 0.0
    %998 = vmatpush.msra.mxu0 0.0
    %999 = vmatpush.msra.mxu0 0.0
    %1000 = vmatpush.msra.mxu0 0.0
    %1001 = vmatpush.msra.mxu0 0.0
    %1002 = vmatpush.msra.mxu0 0.0
    %1003 = vmatpush.msra.mxu0 0.0
    %1004 = vmatpush.msra.mxu0 %v516
    %1005 = vmatmul.f32.gmra.mxu0 %v987
    %v1006 = vpop.f32.mrf.mxu0
    %v1007 = vadd.f32 0.0, %v1006
    %1008 = vdwg.mxu0
    %v1010 = vsel %vm627, %v935, 0
    %1012 = vmatpush.msra.mxu0 0.0
    %1013 = vmatpush.msra.mxu0 0.0
    %1014 = vmatpush.msra.mxu0 0.0
    %1015 = vmatpush.msra.mxu0 0.0
    %1016 = vmatpush.msra.mxu0 0.0
    %1017 = vmatpush.msra.mxu0 0.0
    %1018 = vmatpush.msra.mxu0 0.0
    %1019 = vmatpush.msra.mxu0 0.0
    %1020 = vmatpush.msra.mxu0 0.0
    %1021 = vmatpush.msra.mxu0 0.0
    %1022 = vmatpush.msra.mxu0 0.0
    %1023 = vmatpush.msra.mxu0 0.0
    %1024 = vmatpush.msra.mxu0 0.0
    %1025 = vmatpush.msra.mxu0 0.0
    %1026 = vmatpush.msra.mxu0 0.0
    %1027 = vmatpush.msra.mxu0 %v536
    %1028 = vmatmul.f32.gmra.mxu0 %v1010
    %v1029 = vpop.f32.mrf.mxu0
    %v1030 = vadd.f32 0.0, %v1029
    %1031 = vdwg.mxu0
    %v1033 = vsel %vm627, %v936, 0
    %1035 = vmatpush.msra.mxu0 0.0
    %1036 = vmatpush.msra.mxu0 0.0
    %1037 = vmatpush.msra.mxu0 0.0
    %1038 = vmatpush.msra.mxu0 0.0
    %1039 = vmatpush.msra.mxu0 0.0
    %1040 = vmatpush.msra.mxu0 0.0
    %1041 = vmatpush.msra.mxu0 0.0
    %1042 = vmatpush.msra.mxu0 0.0
    %1043 = vmatpush.msra.mxu0 0.0
    %1044 = vmatpush.msra.mxu0 0.0
    %1045 = vmatpush.msra.mxu0 0.0
    %1046 = vmatpush.msra.mxu0 0.0
    %1047 = vmatpush.msra.mxu0 0.0
    %1048 = vmatpush.msra.mxu0 0.0
    %1049 = vmatpush.msra.mxu0 0.0
    %1050 = vmatpush.msra.mxu0 %v556
    %1051 = vmatmul.f32.gmra.mxu0 %v1033
    %v1052 = vpop.f32.mrf.mxu0
    %v1053 = vadd.f32 0.0, %v1052
    %1054 = vdwg.mxu0
    %v1056 = vsel %vm627, %v937, 0
    %1058 = vmatpush.msra.mxu0 0.0
    %1059 = vmatpush.msra.mxu0 0.0
    %1060 = vmatpush.msra.mxu0 0.0
    %1061 = vmatpush.msra.mxu0 0.0
    %1062 = vmatpush.msra.mxu0 0.0
    %1063 = vmatpush.msra.mxu0 0.0
    %1064 = vmatpush.msra.mxu0 0.0
    %1065 = vmatpush.msra.mxu0 0.0
    %1066 = vmatpush.msra.mxu0 0.0
    %1067 = vmatpush.msra.mxu0 0.0
    %1068 = vmatpush.msra.mxu0 0.0
    %1069 = vmatpush.msra.mxu0 0.0
    %1070 = vmatpush.msra.mxu0 0.0
    %1071 = vmatpush.msra.mxu0 0.0
    %1072 = vmatpush.msra.mxu0 0.0
    %1073 = vmatpush.msra.mxu0 %v576
    %1074 = vmatmul.f32.gmra.mxu0 %v1056
    %v1075 = vpop.f32.mrf.mxu0
    %v1076 = vadd.f32 0.0, %v1075
    %1077 = vdwg.mxu0
    %v1079 = vsel %vm627, %v938, 0
    %1081 = vmatpush.msra.mxu0 0.0
    %1082 = vmatpush.msra.mxu0 0.0
    %1083 = vmatpush.msra.mxu0 0.0
    %1084 = vmatpush.msra.mxu0 0.0
    %1085 = vmatpush.msra.mxu0 0.0
    %1086 = vmatpush.msra.mxu0 0.0
    %1087 = vmatpush.msra.mxu0 0.0
    %1088 = vmatpush.msra.mxu0 0.0
    %1089 = vmatpush.msra.mxu0 0.0
    %1090 = vmatpush.msra.mxu0 0.0
    %1091 = vmatpush.msra.mxu0 0.0
    %1092 = vmatpush.msra.mxu0 0.0
    %1093 = vmatpush.msra.mxu0 0.0
    %1094 = vmatpush.msra.mxu0 0.0
    %1095 = vmatpush.msra.mxu0 0.0
    %1096 = vmatpush.msra.mxu0 %v596
    %1097 = vmatmul.f32.gmra.mxu0 %v1079
    %v1098 = vpop.f32.mrf.mxu0
    %v1099 = vadd.f32 0.0, %v1098
    %1100 = vdwg.mxu0
    %v1102 = vsel %vm627, %v939, 0
    %1104 = vmatpush.msra.mxu0 0.0
    %1105 = vmatpush.msra.mxu0 0.0
    %1106 = vmatpush.msra.mxu0 0.0
    %1107 = vmatpush.msra.mxu0 0.0
    %1108 = vmatpush.msra.mxu0 0.0
    %1109 = vmatpush.msra.mxu0 0.0
    %1110 = vmatpush.msra.mxu0 0.0
    %1111 = vmatpush.msra.mxu0 0.0
    %1112 = vmatpush.msra.mxu0 0.0
    %1113 = vmatpush.msra.mxu0 0.0
    %1114 = vmatpush.msra.mxu0 0.0
    %1115 = vmatpush.msra.mxu0 0.0
    %1116 = vmatpush.msra.mxu0 0.0
    %1117 = vmatpush.msra.mxu0 0.0
    %1118 = vmatpush.msra.mxu0 0.0
    %1119 = vmatpush.msra.mxu0 %v616
    %1120 = vmatmul.f32.gmra.mxu0 %v1102
    %v1121 = vpop.f32.mrf.mxu0
    %v1122 = vadd.f32 0.0, %v1121
    %1123 = vdwg.mxu0
    %v1124 = vld [vmem:[%s4] sm:$0xff]
    %v1125 = vld [vmem:[%s4 + $0x8] sm:$0xff]
    %v1126 = vld [vmem:[%s4 + $0x10] sm:$0xff]
    %v1127 = vld [vmem:[%s4 + $0x18] sm:$0xff]
    %v1129 = vsel %vm627, %v961, 0
    %1131 = vmatpush.msra.mxu0 0.0
    %1132 = vmatpush.msra.mxu0 0.0
    %1133 = vmatpush.msra.mxu0 0.0
    %1134 = vmatpush.msra.mxu0 0.0
    %1135 = vmatpush.msra.mxu0 0.0
    %1136 = vmatpush.msra.mxu0 0.0
    %1137 = vmatpush.msra.mxu0 0.0
    %1138 = vmatpush.msra.mxu0 0.0
    %1139 = vmatpush.msra.mxu0 0.0
    %1140 = vmatpush.msra.mxu0 0.0
    %1141 = vmatpush.msra.mxu0 0.0
    %1142 = vmatpush.msra.mxu0 0.0
    %1143 = vmatpush.msra.mxu0 0.0
    %1144 = vmatpush.msra.mxu0 0.0
    %1145 = vmatpush.msra.mxu0 0.0
    %1146 = vmatpush.msra.mxu0 %v1124
    %1147 = vmatmul.f32.gmra.mxu0 %v1129
    %v1148 = vpop.f32.mrf.mxu0
    %v1149 = vadd.f32 0.0, %v1148
    %1150 = vdwg.mxu0
    %v1152 = vsel %vm627, %v984, 0
    %1154 = vmatpush.msra.mxu0 0.0
    %1155 = vmatpush.msra.mxu0 0.0
    %1156 = vmatpush.msra.mxu0 0.0
    %1157 = vmatpush.msra.mxu0 0.0
    %1158 = vmatpush.msra.mxu0 0.0
    %1159 = vmatpush.msra.mxu0 0.0
    %1160 = vmatpush.msra.mxu0 0.0
    %1161 = vmatpush.msra.mxu0 0.0
    %1162 = vmatpush.msra.mxu0 0.0
    %1163 = vmatpush.msra.mxu0 0.0
    %1164 = vmatpush.msra.mxu0 0.0
    %1165 = vmatpush.msra.mxu0 0.0
    %1166 = vmatpush.msra.mxu0 0.0
    %1167 = vmatpush.msra.mxu0 0.0
    %1168 = vmatpush.msra.mxu0 0.0
    %1169 = vmatpush.msra.mxu0 %v1125
    %1170 = vmatmul.f32.gmra.mxu0 %v1152
    %v1171 = vpop.f32.mrf.mxu0
    %v1172 = vadd.f32 0.0, %v1171
    %1173 = vdwg.mxu0
    %v1175 = vsel %vm627, %v1007, 0
    %1177 = vmatpush.msra.mxu0 0.0
    %1178 = vmatpush.msra.mxu0 0.0
    %1179 = vmatpush.msra.mxu0 0.0
    %1180 = vmatpush.msra.mxu0 0.0
    %1181 = vmatpush.msra.mxu0 0.0
    %1182 = vmatpush.msra.mxu0 0.0
    %1183 = vmatpush.msra.mxu0 0.0
    %1184 = vmatpush.msra.mxu0 0.0
    %1185 = vmatpush.msra.mxu0 0.0
    %1186 = vmatpush.msra.mxu0 0.0
    %1187 = vmatpush.msra.mxu0 0.0
    %1188 = vmatpush.msra.mxu0 0.0
    %1189 = vmatpush.msra.mxu0 0.0
    %1190 = vmatpush.msra.mxu0 0.0
    %1191 = vmatpush.msra.mxu0 0.0
    %1192 = vmatpush.msra.mxu0 %v1126
    %1193 = vmatmul.f32.gmra.mxu0 %v1175
    %v1194 = vpop.f32.mrf.mxu0
    %v1195 = vadd.f32 0.0, %v1194
    %1196 = vdwg.mxu0
    %v1198 = vsel %vm627, %v1030, 0
    %1200 = vmatpush.msra.mxu0 0.0
    %1201 = vmatpush.msra.mxu0 0.0
    %1202 = vmatpush.msra.mxu0 0.0
    %1203 = vmatpush.msra.mxu0 0.0
    %1204 = vmatpush.msra.mxu0 0.0
    %1205 = vmatpush.msra.mxu0 0.0
    %1206 = vmatpush.msra.mxu0 0.0
    %1207 = vmatpush.msra.mxu0 0.0
    %1208 = vmatpush.msra.mxu0 0.0
    %1209 = vmatpush.msra.mxu0 0.0
    %1210 = vmatpush.msra.mxu0 0.0
    %1211 = vmatpush.msra.mxu0 0.0
    %1212 = vmatpush.msra.mxu0 0.0
    %1213 = vmatpush.msra.mxu0 0.0
    %1214 = vmatpush.msra.mxu0 0.0
    %1215 = vmatpush.msra.mxu0 %v1127
    %1216 = vmatmul.f32.gmra.mxu0 %v1198
    %v1217 = vpop.f32.mrf.mxu0
    %v1218 = vadd.f32 0.0, %v1217
    %1219 = vdwg.mxu0
    %v1221 = vsel %vm627, %v1053, 0
    %1223 = vmatpush.msra.mxu0 0.0
    %1224 = vmatpush.msra.mxu0 0.0
    %1225 = vmatpush.msra.mxu0 0.0
    %1226 = vmatpush.msra.mxu0 0.0
    %1227 = vmatpush.msra.mxu0 0.0
    %1228 = vmatpush.msra.mxu0 0.0
    %1229 = vmatpush.msra.mxu0 0.0
    %1230 = vmatpush.msra.mxu0 0.0
    %1231 = vmatpush.msra.mxu0 0.0
    %1232 = vmatpush.msra.mxu0 0.0
    %1233 = vmatpush.msra.mxu0 0.0
    %1234 = vmatpush.msra.mxu0 0.0
    %1235 = vmatpush.msra.mxu0 0.0
    %1236 = vmatpush.msra.mxu0 0.0
    %1237 = vmatpush.msra.mxu0 0.0
    %1238 = vmatpush.msra.mxu0 %v1124
    %1239 = vmatmul.f32.gmra.mxu0 %v1221
    %v1240 = vpop.f32.mrf.mxu0
    %v1241 = vadd.f32 0.0, %v1240
    %1242 = vdwg.mxu0
    %v1244 = vsel %vm627, %v1076, 0
    %1246 = vmatpush.msra.mxu0 0.0
    %1247 = vmatpush.msra.mxu0 0.0
    %1248 = vmatpush.msra.mxu0 0.0
    %1249 = vmatpush.msra.mxu0 0.0
    %1250 = vmatpush.msra.mxu0 0.0
    %1251 = vmatpush.msra.mxu0 0.0
    %1252 = vmatpush.msra.mxu0 0.0
    %1253 = vmatpush.msra.mxu0 0.0
    %1254 = vmatpush.msra.mxu0 0.0
    %1255 = vmatpush.msra.mxu0 0.0
    %1256 = vmatpush.msra.mxu0 0.0
    %1257 = vmatpush.msra.mxu0 0.0
    %1258 = vmatpush.msra.mxu0 0.0
    %1259 = vmatpush.msra.mxu0 0.0
    %1260 = vmatpush.msra.mxu0 0.0
    %1261 = vmatpush.msra.mxu0 %v1125
    %1262 = vmatmul.f32.gmra.mxu0 %v1244
    %v1263 = vpop.f32.mrf.mxu0
    %v1264 = vadd.f32 0.0, %v1263
    %1265 = vdwg.mxu0
    %v1267 = vsel %vm627, %v1099, 0
    %1269 = vmatpush.msra.mxu0 0.0
    %1270 = vmatpush.msra.mxu0 0.0
    %1271 = vmatpush.msra.mxu0 0.0
    %1272 = vmatpush.msra.mxu0 0.0
    %1273 = vmatpush.msra.mxu0 0.0
    %1274 = vmatpush.msra.mxu0 0.0
    %1275 = vmatpush.msra.mxu0 0.0
    %1276 = vmatpush.msra.mxu0 0.0
    %1277 = vmatpush.msra.mxu0 0.0
    %1278 = vmatpush.msra.mxu0 0.0
    %1279 = vmatpush.msra.mxu0 0.0
    %1280 = vmatpush.msra.mxu0 0.0
    %1281 = vmatpush.msra.mxu0 0.0
    %1282 = vmatpush.msra.mxu0 0.0
    %1283 = vmatpush.msra.mxu0 0.0
    %1284 = vmatpush.msra.mxu0 %v1126
    %1285 = vmatmul.f32.gmra.mxu0 %v1267
    %v1286 = vpop.f32.mrf.mxu0
    %v1287 = vadd.f32 0.0, %v1286
    %1288 = vdwg.mxu0
    %v1290 = vsel %vm627, %v1122, 0
    %1292 = vmatpush.msra.mxu0 0.0
    %1293 = vmatpush.msra.mxu0 0.0
    %1294 = vmatpush.msra.mxu0 0.0
    %1295 = vmatpush.msra.mxu0 0.0
    %1296 = vmatpush.msra.mxu0 0.0
    %1297 = vmatpush.msra.mxu0 0.0
    %1298 = vmatpush.msra.mxu0 0.0
    %1299 = vmatpush.msra.mxu0 0.0
    %1300 = vmatpush.msra.mxu0 0.0
    %1301 = vmatpush.msra.mxu0 0.0
    %1302 = vmatpush.msra.mxu0 0.0
    %1303 = vmatpush.msra.mxu0 0.0
    %1304 = vmatpush.msra.mxu0 0.0
    %1305 = vmatpush.msra.mxu0 0.0
    %1306 = vmatpush.msra.mxu0 0.0
    %1307 = vmatpush.msra.mxu0 %v1127
    %1308 = vmatmul.f32.gmra.mxu0 %v1290
    %v1309 = vpop.f32.mrf.mxu0
    %v1310 = vadd.f32 0.0, %v1309
    %1311 = vdwg.mxu0
    %v1312 = vld [vmem:[%s8] sm:$0x3f]
    %v1313 = vsel %vm107, %v1149, 0.0
    %v1314 = vsel %vm107, %v1172, 0.0
    %v1315 = vadd.f32 %v1313, %v1314
    %v1316 = vsel %vm107, %v1195, 0.0
    %v1317 = vadd.f32 %v1315, %v1316
    %v1318 = vsel %vm107, %v1218, 0.0
    %v1319 = vadd.f32 %v1317, %v1318
    %v1320 = vsel %vm107, %v1241, 0.0
    %v1321 = vsel %vm107, %v1264, 0.0
    %v1322 = vadd.f32 %v1320, %v1321
    %v1323 = vsel %vm107, %v1287, 0.0
    %v1324 = vadd.f32 %v1322, %v1323
    %v1325 = vsel %vm107, %v1310, 0.0
    %v1326 = vadd.f32 %v1324, %v1325
    %v1327 = vperm.slane %v1312, 0
    %v1328 = vadd.f32 %v1319, %v1327
    %v1329 = vadd.f32 %v1326, %v1327
    %v1330 = vadd.f32 %v1328, %v33
    %v1331 = vadd.f32 %v1329, %v34
    %v1332 = vsel %vm107, %v1330, 0.0
    %1333 = vadd.xlane.f32.xlu0 %v1332
    %v1334 = vpop.xlane.xlu0 %1333
    %v1335 = vsel %vm107, %v1331, 0.0
    %1336 = vadd.xlane.f32.xlu0 %v1335
    %v1337 = vpop.xlane.xlu0 %1336
    %v1338 = vrcp.pop 32.0
    %v1339 = vmul.f32 32.0, %v1338
    %v1340 = vsub.f32 1.0, %v1339
    %v1341 = vmul.f32 %v1338, %v1340
    %v1342 = vadd.f32 %v1338, %v1341
    %vm1343 = vweird.f32 %v1338
    %v1344 = vsel %vm1343, %v1338, %v1342
    %v1345 = vmul.f32 %v1334, %v1344
    %v1346 = vmul.f32 %v1337, %v1344
    %v1347 = vmul.f32 %v1330, %v1330
    %v1348 = vmul.f32 %v1331, %v1331
    %v1349 = vsel %vm107, %v1347, 0.0
    %1350 = vadd.xlane.f32.xlu0 %v1349
    %v1351 = vpop.xlane.xlu0 %1350
    %v1352 = vsel %vm107, %v1348, 0.0
    %1353 = vadd.xlane.f32.xlu0 %v1352
    %v1354 = vpop.xlane.xlu0 %1353
    %v1355 = vmul.f32 %v1351, %v1344
    %v1356 = vmul.f32 %v1354, %v1344
    %v1357 = vmul.f32 %v1345, %v1345
    %v1358 = vmul.f32 %v1346, %v1346
    %v1359 = vsub.f32 %v1355, %v1357
    %v1360 = vsub.f32 %v1356, %v1358
    %v1361 = vadd.f32 %v1359, 1e-05
    %v1362 = vadd.f32 %v1360, 1e-05
    %v1363 = vrsqrt.pop %v1361
    %v1364 = vmul.f32 %v1363, %v1361
    %v1365 = vmul.f32 %v1364, %v1363
    %v1366 = vmul.f32 0.5, %v1365
    %v1367 = vsub.f32 1.5, %v1366
    %v1368 = vmul.f32 %v1363, %v1367
    %vm1369 = vweird.f32 %v1361
    %vm1370 = vweird.f32 %v1363
    %vm1371 = vmor %vm1369, %vm1370
    %v1372 = vsel %vm1371, %v1363, %v1368
    %v1373 = vrsqrt.pop %v1362
    %v1374 = vmul.f32 %v1373, %v1362
    %v1375 = vmul.f32 %v1374, %v1373
    %v1376 = vmul.f32 0.5, %v1375
    %v1377 = vsub.f32 1.5, %v1376
    %v1378 = vmul.f32 %v1373, %v1377
    %vm1379 = vweird.f32 %v1362
    %vm1380 = vweird.f32 %v1373
    %vm1381 = vmor %vm1379, %vm1380
    %v1382 = vsel %vm1381, %v1373, %v1378
    %v1383 = vsub.f32 %v1330, %v1345
    %v1384 = vsub.f32 %v1331, %v1346
    %v1385 = vmul.f32 %v1383, %v1372
    %v1386 = vmul.f32 %v1384, %v1382
    %v1387 = vperm.slane %v1312, 1
    %v1388 = vmul.f32 %v1385, %v1387
    %v1389 = vmul.f32 %v1386, %v1387
    %v1390 = vperm.slane %v1312, 2
    %v1391 = vadd.f32 %v1388, %v1390
    %v1392 = vadd.f32 %v1389, %v1390
    %v1393 = vld [vmem:[%s5] sm:$0xff]
    %v1394 = vld [vmem:[%s5 + $0x8] sm:$0xff]
    %v1395 = vld [vmem:[%s5 + $0x10] sm:$0xff]
    %v1396 = vld [vmem:[%s5 + $0x18] sm:$0xff]
    %v1397 = vld [vmem:[%s6] sm:$0x1]
    %v1399 = vperm.slane %v1397, 0
    %v1402 = vsel %vm107, %v1391, 0
    %v1405 = vsel %vm107, %v1392, 0
    %1407 = vmatpush.msra.mxu0 0.0
    %1408 = vmatpush.msra.mxu0 0.0
    %1409 = vmatpush.msra.mxu0 0.0
    %1410 = vmatpush.msra.mxu0 0.0
    %1411 = vmatpush.msra.mxu0 0.0
    %1412 = vmatpush.msra.mxu0 0.0
    %1413 = vmatpush.msra.mxu0 0.0
    %1414 = vmatpush.msra.mxu0 0.0
    %1415 = vmatpush.msra.mxu0 0.0
    %1416 = vmatpush.msra.mxu0 0.0
    %1417 = vmatpush.msra.mxu0 0.0
    %1418 = vmatpush.msra.mxu0 0.0
    %1419 = vmatpush.msra.mxu0 %v1396
    %1420 = vmatpush.msra.mxu0 %v1395
    %1421 = vmatpush.msra.mxu0 %v1394
    %1422 = vmatpush.msra.mxu0 %v1393
    %1423 = vmatmul.f32.gmra.mxu0 %v1402
    %v1424 = vpop.f32.mrf.mxu0
    %v1425 = vadd.f32 %v1399, %v1424
    %1426 = vmatmul.f32.gmra.mxu0 %v1405
    %v1427 = vpop.f32.mrf.mxu0
    %v1428 = vadd.f32 %v1399, %v1427
    %1429 = vdwg.mxu0
    %v1430 = vmax.f32 %v1425, 0.0
    %v1431 = vmax.f32 %v1428, 0.0
    %v1432 = vld [vmem:[%s7] sm:$0xff]
    %v1433 = vld [vmem:[%s7 + $0x8] sm:$0xff]
    %v1434 = vld [vmem:[%s7 + $0x10] sm:$0xff]
    %v1435 = vld [vmem:[%s7 + $0x18] sm:$0xff]
    %v1436 = vld [vmem:[%s7 + $0x20] sm:$0xff]
    %v1437 = vld [vmem:[%s7 + $0x28] sm:$0xff]
    %v1438 = vld [vmem:[%s7 + $0x30] sm:$0xff]
    %v1439 = vld [vmem:[%s7 + $0x38] sm:$0xff]
    %v1440 = vperm.slane %v1312, 3
    %vm1441 = vcmask 523264
    %v1443 = vsel %vm1441, %v1430, 0
    %v1446 = vsel %vm1441, %v1431, 0
    %1448 = vmatpush.msra.mxu0 0.0
    %1449 = vmatpush.msra.mxu0 0.0
    %1450 = vmatpush.msra.mxu0 0.0
    %1451 = vmatpush.msra.mxu0 0.0
    %1452 = vmatpush.msra.mxu0 0.0
    %1453 = vmatpush.msra.mxu0 0.0
    %1454 = vmatpush.msra.mxu0 0.0
    %1455 = vmatpush.msra.mxu0 0.0
    %1456 = vmatpush.msra.mxu0 %v1439
    %1457 = vmatpush.msra.mxu0 %v1438
    %1458 = vmatpush.msra.mxu0 %v1437
    %1459 = vmatpush.msra.mxu0 %v1436
    %1460 = vmatpush.msra.mxu0 %v1435
    %1461 = vmatpush.msra.mxu0 %v1434
    %1462 = vmatpush.msra.mxu0 %v1433
    %1463 = vmatpush.msra.mxu0 %v1432
    %1464 = vmatmul.f32.gmra.mxu0 %v1443
    %v1465 = vpop.f32.mrf.mxu0
    %v1466 = vadd.f32 %v1440, %v1465
    %1467 = vmatmul.f32.gmra.mxu0 %v1446
    %v1468 = vpop.f32.mrf.mxu0
    %v1469 = vadd.f32 %v1440, %v1468
    %1470 = vdwg.mxu0
    %v1471 = vadd.f32 %v1466, %v1391
    %v1472 = vadd.f32 %v1469, %v1392
    %v1473 = vsel %vm107, %v1471, 0.0
    %1474 = vadd.xlane.f32.xlu0 %v1473
    %v1475 = vpop.xlane.xlu0 %1474
    %v1476 = vsel %vm107, %v1472, 0.0
    %1477 = vadd.xlane.f32.xlu0 %v1476
    %v1478 = vpop.xlane.xlu0 %1477
    %v1479 = vmul.f32 %v1475, %v1344
    %v1480 = vmul.f32 %v1478, %v1344
    %v1481 = vmul.f32 %v1471, %v1471
    %v1482 = vmul.f32 %v1472, %v1472
    %v1483 = vsel %vm107, %v1481, 0.0
    %1484 = vadd.xlane.f32.xlu0 %v1483
    %v1485 = vpop.xlane.xlu0 %1484
    %v1486 = vsel %vm107, %v1482, 0.0
    %1487 = vadd.xlane.f32.xlu0 %v1486
    %v1488 = vpop.xlane.xlu0 %1487
    %v1489 = vmul.f32 %v1485, %v1344
    %v1490 = vmul.f32 %v1488, %v1344
    %v1491 = vmul.f32 %v1479, %v1479
    %v1492 = vmul.f32 %v1480, %v1480
    %v1493 = vsub.f32 %v1489, %v1491
    %v1494 = vsub.f32 %v1490, %v1492
    %v1495 = vadd.f32 %v1493, 1e-05
    %v1496 = vadd.f32 %v1494, 1e-05
    %v1497 = vrsqrt.pop %v1495
    %v1498 = vmul.f32 %v1497, %v1495
    %v1499 = vmul.f32 %v1498, %v1497
    %v1500 = vmul.f32 0.5, %v1499
    %v1501 = vsub.f32 1.5, %v1500
    %v1502 = vmul.f32 %v1497, %v1501
    %vm1503 = vweird.f32 %v1495
    %vm1504 = vweird.f32 %v1497
    %vm1505 = vmor %vm1503, %vm1504
    %v1506 = vsel %vm1505, %v1497, %v1502
    %v1507 = vrsqrt.pop %v1496
    %v1508 = vmul.f32 %v1507, %v1496
    %v1509 = vmul.f32 %v1508, %v1507
    %v1510 = vmul.f32 0.5, %v1509
    %v1511 = vsub.f32 1.5, %v1510
    %v1512 = vmul.f32 %v1507, %v1511
    %vm1513 = vweird.f32 %v1496
    %vm1514 = vweird.f32 %v1507
    %vm1515 = vmor %vm1513, %vm1514
    %v1516 = vsel %vm1515, %v1507, %v1512
    %v1517 = vsub.f32 %v1471, %v1479
    %v1518 = vsub.f32 %v1472, %v1480
    %v1519 = vmul.f32 %v1517, %v1506
    %v1520 = vmul.f32 %v1518, %v1516
    %v1521 = vperm.slane %v1312, 4
    %v1522 = vmul.f32 %v1519, %v1521
    %v1523 = vmul.f32 %v1520, %v1521
    %v1524 = vperm.slane %v1312, 5
    %v1525 = vadd.f32 %v1522, %v1524
    %v1526 = vadd.f32 %v1523, %v1524
    %1527 = vst.msk [vmem:[#allocation2] sm:$0xff] %vm107, %v1525
    %1528 = vst.msk [vmem:[#allocation2 + $0x8] sm:$0xff] %vm107, %v1526
    // Predicated region
    $region38: #{tpu_custom_call.1} parent=1 // pred_check
      _
    $region39: #{tpu_custom_call.1} parent=1 // pred_check_branch
      %1530 = sbr.rel (0) target = $region41
    $region40: #{tpu_custom_call.1} parent=1 // pred_region
      %1532 = vsyncadd [#allocation3], 0
      %s1533 = sshll.u32 [#allocation2], 4
      %s1534 = int_to_ptr.vmem [resolvable:$true] %s1533
      %s1535 = sshll.u32 %s9, 4
      %s1536 = int_to_ptr.hbm [resolvable:$true] %s1535
      %1541 = dma.vmem_to_hbm [thread:$0]  %s1534, 256, %s1536, [#allocation3], 128, 128, 8
    $region41: #{tpu_custom_call.1} parent=1 // pred_fallthru
      _
    // Predicated region
    $region42: #{tpu_custom_call.1} parent=1 // pred_check
      _
    $region43: #{tpu_custom_call.1} parent=1 // pred_check_branch
      %1543 = sbr.rel (0) target = $region45
    $region44: #{tpu_custom_call.1} parent=1 // pred_region
      %1545 = dma.done [#allocation3], 256
    $region45: #{tpu_custom_call.1} parent=1 // pred_fallthru
      _
    %1546 = vsyncpa [#allocation3], 1

</llo_original>
